<compile_context>
chip_gen: v6e
topology: v6e:2x2x1
jax: 0.10.0
libtpu: 0.0.40
codegen_flags: <defaults>
</compile_context>

<pallas_src>
import functools
import math

import jax
import jax.numpy as jnp
from jax.experimental import pallas as pl
from jax.experimental.pallas import tpu as pltpu

LANE = 128
ROW_ALIGN = 16   # bf16 packs 16 rows per sublane group


def _round_up(n, m):
    return ((n + m - 1) // m) * m


# ----------------------------------------------------------------------------
# Fused kernel: whole VaContrastive forward for one batch tile.
# refs = [weak_x, strong_x, eps_w, eps_s,  (w,b)*n_pairs ,  packed_out]
# Pair order: encoder layers | fused mu/var head | projector | latent3 | decoder
# ----------------------------------------------------------------------------
def _va_kernel(*refs, n_enc, n_proj, n_dec, enc_acts, proj_acts, dec_acts,
               dz, dl, d_out):
    n_pairs = n_enc + 1 + n_proj + 1 + n_dec
    weak_x_ref, strong_x_ref, eps_w_ref, eps_s_ref = refs[:4]
    param_refs = refs[4:4 + 2 * n_pairs]
    out_ref = refs[4 + 2 * n_pairs]

    T = weak_x_ref.shape[0]

    def pair(i):
        return param_refs[2 * i], param_refs[2 * i + 1]

    def linear(x, w_ref, b_ref, act=None):
        # bf16 operands on the MXU, f32 accumulation / bias / activation.
        y = jnp.dot(x.astype(jnp.bfloat16), w_ref[...],
                    preferred_element_type=jnp.float32)
        y = y + b_ref[...]          # (1, Out) f32 bias broadcasts over rows
        if act == "relu":
            y = jnp.maximum(y, 0.0)
        elif act == "sigmoid":
            y = jax.nn.sigmoid(y)
        return y

    def mlp(x, start, acts):
        for k, act in enumerate(acts):
            x = linear(x, *pair(start + k), act)
        return x

    # --- shared Encoder + fused mu/var head + reparameterization, run ONCE on
    #     the row-stacked [weak; strong] batch (halves the tiny-matmul count) --
    x_both = jnp.concatenate([weak_x_ref[...], strong_x_ref[...]], axis=0)
    h = mlp(x_both, 0, enc_acts)                       # (2T, enc_last_pad)

    mv = linear(h, *pair(n_enc))                       # fused heads: (2T, 2*dz_pad)
    dz_pad = mv.shape[-1] // 2
    mu = mv[:, :dz]                                    # valid mu lanes (2T, dz)
    var = mv[:, dz_pad:dz_pad + dz]                    # valid var lanes (2T, dz)

    eps_both = jnp.concatenate([eps_w_ref[...], eps_s_ref[...]], axis=0)
    z = jnp.exp(var * 0.5) * eps_both + mu             # (2T, dz) f32

    weak_z, strong_z = z[:T], z[T:]                    # sublane-aligned row split
    weak_mu, strong_mu = mu[:T], mu[T:]
    weak_var, strong_var = var[:T], var[T:]

    # --- Projector + latent3 + Decoder on the true-width lane concat ---------
    z_cat = jnp.concatenate([weak_z, strong_z], axis=-1)     # (T, 2*dz)
    proj_start = n_enc + 1
    lat = mlp(z_cat, proj_start, proj_acts)
    lat = linear(lat, *pair(proj_start + n_proj))             # latent3 (no act)
    recon = mlp(lat, proj_start + n_proj + 1, dec_acts)

    # --- pack all 8 results into one lane-dense slab; single wide store ------
    pieces = [weak_z, strong_z, lat[:, :dl], recon[:, :d_out],
              weak_mu, weak_var, strong_mu, strong_var]
    used = sum(int(p.shape[-1]) for p in pieces)
    tail = out_ref.shape[-1] - used
    if tail:
        pieces.append(jnp.zeros((T, tail), jnp.float32))
    out_ref[...] = jnp.concatenate(pieces, axis=-1).astype(out_ref.dtype)


# ----------------------------------------------------------------------------
# Parameter init (nn.Linear defaults, weights stored (in, out) = W.T)
# ----------------------------------------------------------------------------
def init_params(key, input_dim, enc_layers, proj_layers, dec_layers):
    def linear_init(k, fan_in, fan_out):
        kw, kb = jax.random.split(k)
        bound = 1.0 / math.sqrt(fan_in)
        w = jax.random.uniform(kw, (fan_in, fan_out), jnp.float32, -bound, bound)
        b = jax.random.uniform(kb, (fan_out,), jnp.float32, -bound, bound)
        return w, b

    def mlp_init(k, fan_in, widths):
        ps = []
        for wd in widths:
            k, ki = jax.random.split(k)
            ps.append(linear_init(ki, fan_in, wd))
            fan_in = wd
        return k, ps

    key, enc = mlp_init(key, input_dim, enc_layers)
    dz = enc_layers[-1]
    key, kmu, kvar = jax.random.split(key, 3)
    mu = linear_init(kmu, dz, dz)
    var = linear_init(kvar, dz, dz)
    key, proj = mlp_init(key, 2 * dz, proj_layers)
    key, klat = jax.random.split(key)
    lat3 = linear_init(klat, proj_layers[-1], proj_layers[-1])
    key, dec = mlp_init(key, proj_layers[-1], dec_layers)
    return dict(enc=enc, mu=mu, var=var, proj=proj, lat3=lat3, dec=dec)


# ----------------------------------------------------------------------------
# Pack params: weights bf16 (in, out_pad) with out padded to 128 lanes;
# in-dims kept TRUE where the consumed activation is unpadded (first encoder
# layer <- raw x, first projector layer <- true-width z concat).  mu/var heads
# are fused into one (enc_pad, 2*dz_pad) weight.
# ----------------------------------------------------------------------------
def build_padded_params(params, input_dim, enc_layers, proj_layers, dec_layers):
    dz = enc_layers[-1]
    dz_pad = _round_up(dz, LANE)
    flat = []

    def pad_wb(w, b, in_rows, out_pad):
        wp = jnp.zeros((in_rows, out_pad), jnp.float32)
        wp = wp.at[:w.shape[0], :w.shape[1]].set(w)
        bp = jnp.zeros((1, out_pad), jnp.float32).at[0, :b.shape[0]].set(b)
        return [wp.astype(jnp.bfloat16), bp]

    # Encoder: layer 0 keeps the true input width (x is shipped lane-unpadded).
    in_rows = input_dim
    for (w, b), width in zip(params["enc"], enc_layers):
        out_pad = _round_up(width, LANE)
        flat += pad_wb(w, b, in_rows, out_pad)
        in_rows = out_pad

    # Fused mu/var head: mu in lanes [0:dz_pad), var in [dz_pad:2*dz_pad).
    w_mu, b_mu = params["mu"]
    w_var, b_var = params["var"]
    wf = jnp.zeros((in_rows, 2 * dz_pad), jnp.float32)
    wf = wf.at[:dz, :dz].set(w_mu).at[:dz, dz_pad:dz_pad + dz].set(w_var)
    bf = jnp.zeros((1, 2 * dz_pad), jnp.float32)
    bf = bf.at[0, :dz].set(b_mu).at[0, dz_pad:dz_pad + dz].set(b_var)
    flat += [wf.astype(jnp.bfloat16), bf]

    # Projector: layer 0 consumes the true-width concat(weak_z, strong_z).
    in_rows = 2 * dz
    for (w, b), width in zip(params["proj"], proj_layers):
        out_pad = _round_up(width, LANE)
        flat += pad_wb(w, b, in_rows, out_pad)
        in_rows = out_pad

    dl_pad = _round_up(proj_layers[-1], LANE)
    flat += pad_wb(*params["lat3"], dl_pad, dl_pad)

    in_rows = dl_pad
    for (w, b), width in zip(params["dec"], dec_layers):
        out_pad = _round_up(width, LANE)
        flat += pad_wb(w, b, in_rows, out_pad)
        in_rows = out_pad
    return flat


# ----------------------------------------------------------------------------
# Wrapper: single fused pallas_call with a batch grid and one packed output.
# ----------------------------------------------------------------------------
def va_contrastive_pallas(weak_x, strong_x, eps_w, eps_s, flat_padded,
                          input_dim, enc_layers, proj_layers, dec_layers,
                          batch_tile=None):
    B = weak_x.shape[0]
    dz = enc_layers[-1]
    dl = proj_layers[-1]
    d_out = dec_layers[-1]

    # Packed output layout (dense lane offsets, wrapper slices these back out).
    widths = (dz, dz, dl, d_out, dz, dz, dz, dz)
    total_pad = _round_up(sum(widths), LANE)

    # Batch tiling: 16-row granularity; ~256-row tiles but keep >= 2 grid
    # steps whenever possible so v7x's two TensorCores both get work.
    B_pad = _round_up(B, ROW_ALIGN)
    if batch_tile is None:
        n_steps = max(1, B_pad // 256)
        if B_pad >= 2 * ROW_ALIGN:
            n_steps = max(n_steps, 2)
        batch_tile = _round_up(-(-B_pad // n_steps), ROW_ALIGN)
    else:
        batch_tile = _round_up(min(batch_tile, B_pad), ROW_ALIGN)
    B_pad = _round_up(B_pad, batch_tile)
    grid = (B_pad // batch_tile,)

    def pad_rows(a, rows):
        if a.shape[0] == rows:
            return a
        return jnp.pad(a, ((0, rows - a.shape[0]), (0, 0)))

    # Inputs shipped lane-UNPADDED; x as bf16 (first matmul consumes bf16
    # anyway), eps stays f32 for exact reparameterization parity.
    weak_p = pad_rows(weak_x, B_pad).astype(jnp.bfloat16)
    strong_p = pad_rows(strong_x, B_pad).astype(jnp.bfloat16)
    eps_w_p = pad_rows(eps_w, B_pad)
    eps_s_p = pad_rows(eps_s, B_pad)

    # Value-comparison semantics identical to the PyTorch `layer == layers[-1]`.
    enc_acts = tuple("none" if l == enc_layers[-1] else "relu" for l in enc_layers)
    proj_acts = tuple("none" if l == proj_layers[-1] else "relu" for l in proj_layers)
    dec_acts = tuple("sigmoid" if l == dec_layers[-1] else "relu" for l in dec_layers)

    kernel = functools.partial(
        _va_kernel,
        n_enc=len(enc_layers), n_proj=len(proj_layers), n_dec=len(dec_layers),
        enc_acts=enc_acts, proj_acts=proj_acts, dec_acts=dec_acts,
        dz=dz, dl=dl, d_out=d_out)

    def batch_spec(feat):
        return pl.BlockSpec((batch_tile, feat), lambda i: (i, 0))

    def resident_spec(arr):
        nd = arr.ndim
        return pl.BlockSpec(arr.shape, lambda i, _n=nd: (0,) * _n)

    in_specs = [batch_spec(weak_p.shape[1]), batch_spec(strong_p.shape[1]),
                batch_spec(eps_w_p.shape[1]), batch_spec(eps_s_p.shape[1])]
    in_specs += [resident_spec(a) for a in flat_padded]

    out_spec = pl.BlockSpec((batch_tile, total_pad), lambda i: (i, 0))
    out_shape = jax.ShapeDtypeStruct((B_pad, total_pad), jnp.float32)

    packed = pl.pallas_call(
        kernel,
        grid=grid,
        in_specs=in_specs,
        out_specs=out_spec,
        out_shape=out_shape,
        compiler_params=pltpu.CompilerParams(
            dimension_semantics=("parallel",),       # v7x's 2 TCs split batch
            vmem_limit_bytes=32 * 1024 * 1024),
    )(weak_p, strong_p, eps_w_p, eps_s_p, *flat_padded)

    outs, off = [], 0
    for w in widths:
        outs.append(packed[:B, off:off + w])
        off += w
    return tuple(outs)


# ----------------------------------------------------------------------------
# Pure-JAX reference (same bf16-operand / f32-accumulate numerics).
# ----------------------------------------------------------------------------
def va_contrastive_reference(weak_x, strong_x, eps_w, eps_s, params,
                             enc_layers, proj_layers, dec_layers):
    def linear(x, w, b, act=None):
        y = jnp.dot(x.astype(jnp.bfloat16), w.astype(jnp.bfloat16),
                    preferred_element_type=jnp.float32) + b
        if act == "relu":
            y = jnp.maximum(y, 0.0)
        elif act == "sigmoid":
            y = jax.nn.sigmoid(y)
        return y

    def mlp(x, ps, widths, last_act):
        last = widths[-1]
        for (w, b), wd in zip(ps, widths):
            x = linear(x, w, b, last_act if wd == last else "relu")
        return x

    def branch(x, eps):
        h = mlp(x, params["enc"], enc_layers, "none")
        mu = linear(h, *params["mu"])
        var = linear(h, *params["var"])
        return jnp.exp(var * 0.5) * eps + mu, mu, var

    wz, wmu, wvar = branch(weak_x, eps_w)
    sz, smu, svar = branch(strong_x, eps_s)
    z_cat = jnp.concatenate([wz, sz], axis=1)
    lat = mlp(z_cat, params["proj"], proj_layers, "none")
    lat = linear(lat, *params["lat3"])
    recon = mlp(lat, params["dec"], dec_layers, "sigmoid")
    return wz, sz, lat, recon, wmu, wvar, smu, svar


if __name__ == "__main__":
    # Small shapes consistent with the module (scaled-down MLP widths).
    batch = 8
    input_dim = 48
    enc_layers = [64, 32, 16]
    proj_layers = [32, 16]
    dec_layers = [16, 64, 32, 48]   # decoder reconstructs the 48-d input

    key = jax.random.PRNGKey(0)
    key, kx1, kx2, ke1, ke2 = jax.random.split(key, 5)
    weak_x = jax.random.normal(kx1, (batch, input_dim), jnp.float32)
    strong_x = jax.random.normal(kx2, (batch, input_dim), jnp.float32)
    dz = enc_layers[-1]
    eps_w = jax.random.normal(ke1, (batch, dz), jnp.float32)
    eps_s = jax.random.normal(ke2, (batch, dz), jnp.float32)

    params = init_params(key, input_dim, enc_layers, proj_layers, dec_layers)
    flat_padded = build_padded_params(params, input_dim, enc_layers,
                                      proj_layers, dec_layers)

    outs = va_contrastive_pallas(weak_x, strong_x, eps_w, eps_s, flat_padded,
                                 input_dim, enc_layers, proj_layers, dec_layers)
    outs = jax.block_until_ready(outs)

    refs = va_contrastive_reference(weak_x, strong_x, eps_w, eps_s, params,
                                    enc_layers, proj_layers, dec_layers)

    names = ["weak_z", "strong_z", "latent", "recon",
             "weak_mu", "weak_var", "strong_mu", "strong_var"]
    for name, o, r in zip(names, outs, refs):
        assert o.shape == r.shape, (name, o.shape, r.shape)
        err = float(jnp.max(jnp.abs(o - r)))
        assert jnp.allclose(o, r, atol=1e-3, rtol=1e-3), \
            f"{name} mismatch: max abs err {err}"

    print("KERNEL_OK")
</pallas_src>

<mosaic_0001>
module attributes {stable_mosaic.version = 11 : i64} {
  func.func @_va_kernel(%arg0: i32, %arg1: memref<16x48xbf16, #tpu.memory_space<vmem>>, %arg2: memref<16x48xbf16, #tpu.memory_space<vmem>>, %arg3: memref<16x16xf32, #tpu.memory_space<vmem>>, %arg4: memref<16x16xf32, #tpu.memory_space<vmem>>, %arg5: memref<48x128xbf16, #tpu.memory_space<vmem>>, %arg6: memref<1x128xf32, #tpu.memory_space<vmem>>, %arg7: memref<128x128xbf16, #tpu.memory_space<vmem>>, %arg8: memref<1x128xf32, #tpu.memory_space<vmem>>, %arg9: memref<128x128xbf16, #tpu.memory_space<vmem>>, %arg10: memref<1x128xf32, #tpu.memory_space<vmem>>, %arg11: memref<128x256xbf16, #tpu.memory_space<vmem>>, %arg12: memref<1x256xf32, #tpu.memory_space<vmem>>, %arg13: memref<32x128xbf16, #tpu.memory_space<vmem>>, %arg14: memref<1x128xf32, #tpu.memory_space<vmem>>, %arg15: memref<128x128xbf16, #tpu.memory_space<vmem>>, %arg16: memref<1x128xf32, #tpu.memory_space<vmem>>, %arg17: memref<128x128xbf16, #tpu.memory_space<vmem>>, %arg18: memref<1x128xf32, #tpu.memory_space<vmem>>, %arg19: memref<128x128xbf16, #tpu.memory_space<vmem>>, %arg20: memref<1x128xf32, #tpu.memory_space<vmem>>, %arg21: memref<128x128xbf16, #tpu.memory_space<vmem>>, %arg22: memref<1x128xf32, #tpu.memory_space<vmem>>, %arg23: memref<128x128xbf16, #tpu.memory_space<vmem>>, %arg24: memref<1x128xf32, #tpu.memory_space<vmem>>, %arg25: memref<128x128xbf16, #tpu.memory_space<vmem>>, %arg26: memref<1x128xf32, #tpu.memory_space<vmem>>, %arg27: memref<16x256xf32, #tpu.memory_space<vmem>>) attributes {dimension_semantics = [#tpu.dimension_semantics<parallel>], iteration_bounds = array<i64: 1>, scalar_prefetch = 0 : i64, scratch_operands = 0 : i64, tpu.core_type = #tpu.core_type<tc>, window_params = [{transform_indices = @transform_0, window_bounds = array<i64: 16, 48>}, {transform_indices = @transform_1, window_bounds = array<i64: 16, 48>}, {transform_indices = @transform_2, window_bounds = array<i64: 16, 16>}, {transform_indices = @transform_3, window_bounds = array<i64: 16, 16>}, {pipeline_mode = #tpu.pipeline_mode<synchronous>, transform_indices = @transform_4, window_bounds = array<i64: 48, 128>}, {pipeline_mode = #tpu.pipeline_mode<synchronous>, transform_indices = @transform_5, window_bounds = array<i64: 1, 128>}, {pipeline_mode = #tpu.pipeline_mode<synchronous>, transform_indices = @transform_6, window_bounds = array<i64: 128, 128>}, {pipeline_mode = #tpu.pipeline_mode<synchronous>, transform_indices = @transform_7, window_bounds = array<i64: 1, 128>}, {pipeline_mode = #tpu.pipeline_mode<synchronous>, transform_indices = @transform_8, window_bounds = array<i64: 128, 128>}, {pipeline_mode = #tpu.pipeline_mode<synchronous>, transform_indices = @transform_9, window_bounds = array<i64: 1, 128>}, {pipeline_mode = #tpu.pipeline_mode<synchronous>, transform_indices = @transform_10, window_bounds = array<i64: 128, 256>}, {pipeline_mode = #tpu.pipeline_mode<synchronous>, transform_indices = @transform_11, window_bounds = array<i64: 1, 256>}, {pipeline_mode = #tpu.pipeline_mode<synchronous>, transform_indices = @transform_12, window_bounds = array<i64: 32, 128>}, {pipeline_mode = #tpu.pipeline_mode<synchronous>, transform_indices = @transform_13, window_bounds = array<i64: 1, 128>}, {pipeline_mode = #tpu.pipeline_mode<synchronous>, transform_indices = @transform_14, window_bounds = array<i64: 128, 128>}, {pipeline_mode = #tpu.pipeline_mode<synchronous>, transform_indices = @transform_15, window_bounds = array<i64: 1, 128>}, {pipeline_mode = #tpu.pipeline_mode<synchronous>, transform_indices = @transform_16, window_bounds = array<i64: 128, 128>}, {pipeline_mode = #tpu.pipeline_mode<synchronous>, transform_indices = @transform_17, window_bounds = array<i64: 1, 128>}, {pipeline_mode = #tpu.pipeline_mode<synchronous>, transform_indices = @transform_18, window_bounds = array<i64: 128, 128>}, {pipeline_mode = #tpu.pipeline_mode<synchronous>, transform_indices = @transform_19, window_bounds = array<i64: 1, 128>}, {pipeline_mode = #tpu.pipeline_mode<synchronous>, transform_indices = @transform_20, window_bounds = array<i64: 128, 128>}, {pipeline_mode = #tpu.pipeline_mode<synchronous>, transform_indices = @transform_21, window_bounds = array<i64: 1, 128>}, {pipeline_mode = #tpu.pipeline_mode<synchronous>, transform_indices = @transform_22, window_bounds = array<i64: 128, 128>}, {pipeline_mode = #tpu.pipeline_mode<synchronous>, transform_indices = @transform_23, window_bounds = array<i64: 1, 128>}, {pipeline_mode = #tpu.pipeline_mode<synchronous>, transform_indices = @transform_24, window_bounds = array<i64: 128, 128>}, {pipeline_mode = #tpu.pipeline_mode<synchronous>, transform_indices = @transform_25, window_bounds = array<i64: 1, 128>}, {transform_indices = @transform_26, window_bounds = array<i64: 16, 256>}]} {
    %c0 = arith.constant 0 : index
    %c0_0 = arith.constant 0 : index
    %0 = vector.load %arg1[%c0, %c0_0] : memref<16x48xbf16, #tpu.memory_space<vmem>>, vector<16x48xbf16>
    %c0_1 = arith.constant 0 : index
    %c0_2 = arith.constant 0 : index
    %1 = vector.load %arg2[%c0_1, %c0_2] : memref<16x48xbf16, #tpu.memory_space<vmem>>, vector<16x48xbf16>
    %2 = tpu.concatenate %0, %1 in 0 : vector<16x48xbf16>, vector<16x48xbf16> -> vector<32x48xbf16>
    %c0_3 = arith.constant 0 : index
    %c0_4 = arith.constant 0 : index
    %3 = vector.load %arg5[%c0_3, %c0_4] : memref<48x128xbf16, #tpu.memory_space<vmem>>, vector<48x128xbf16>
    %cst = arith.constant dense<0.000000e+00> : vector<32x128xf32>
    %4 = tpu.matmul %2, %3, %cst {dimension_numbers = #tpu.dot_dimension_numbers<[1], [0], [0], [1], [0, 0, 1, 1], [], []>} : vector<32x48xbf16>, vector<48x128xbf16>, vector<32x128xf32> -> vector<32x128xf32>
    %c0_5 = arith.constant 0 : index
    %c0_6 = arith.constant 0 : index
    %5 = vector.load %arg6[%c0_5, %c0_6] : memref<1x128xf32, #tpu.memory_space<vmem>>, vector<1x128xf32>
    %6 = vector.broadcast %5 : vector<1x128xf32> to vector<32x128xf32>
    %7 = arith.addf %4, %6 : vector<32x128xf32>
    %cst_7 = arith.constant 0.000000e+00 : f32
    %8 = vector.broadcast %cst_7 : f32 to vector<32x128xf32>
    %9 = arith.maximumf %7, %8 : vector<32x128xf32>
    %10 = arith.truncf %9 : vector<32x128xf32> to vector<32x128xbf16>
    %c0_8 = arith.constant 0 : index
    %c0_9 = arith.constant 0 : index
    %11 = vector.load %arg7[%c0_8, %c0_9] : memref<128x128xbf16, #tpu.memory_space<vmem>>, vector<128x128xbf16>
    %cst_10 = arith.constant dense<0.000000e+00> : vector<32x128xf32>
    %12 = tpu.matmul %10, %11, %cst_10 {dimension_numbers = #tpu.dot_dimension_numbers<[1], [0], [0], [1], [0, 0, 1, 1], [], []>} : vector<32x128xbf16>, vector<128x128xbf16>, vector<32x128xf32> -> vector<32x128xf32>
    %c0_11 = arith.constant 0 : index
    %c0_12 = arith.constant 0 : index
    %13 = vector.load %arg8[%c0_11, %c0_12] : memref<1x128xf32, #tpu.memory_space<vmem>>, vector<1x128xf32>
    %14 = vector.broadcast %13 : vector<1x128xf32> to vector<32x128xf32>
    %15 = arith.addf %12, %14 : vector<32x128xf32>
    %cst_13 = arith.constant 0.000000e+00 : f32
    %16 = vector.broadcast %cst_13 : f32 to vector<32x128xf32>
    %17 = arith.maximumf %15, %16 : vector<32x128xf32>
    %18 = arith.truncf %17 : vector<32x128xf32> to vector<32x128xbf16>
    %c0_14 = arith.constant 0 : index
    %c0_15 = arith.constant 0 : index
    %19 = vector.load %arg9[%c0_14, %c0_15] : memref<128x128xbf16, #tpu.memory_space<vmem>>, vector<128x128xbf16>
    %cst_16 = arith.constant dense<0.000000e+00> : vector<32x128xf32>
    %20 = tpu.matmul %18, %19, %cst_16 {dimension_numbers = #tpu.dot_dimension_numbers<[1], [0], [0], [1], [0, 0, 1, 1], [], []>} : vector<32x128xbf16>, vector<128x128xbf16>, vector<32x128xf32> -> vector<32x128xf32>
    %c0_17 = arith.constant 0 : index
    %c0_18 = arith.constant 0 : index
    %21 = vector.load %arg10[%c0_17, %c0_18] : memref<1x128xf32, #tpu.memory_space<vmem>>, vector<1x128xf32>
    %22 = vector.broadcast %21 : vector<1x128xf32> to vector<32x128xf32>
    %23 = arith.addf %20, %22 : vector<32x128xf32>
    %24 = arith.truncf %23 : vector<32x128xf32> to vector<32x128xbf16>
    %c0_19 = arith.constant 0 : index
    %c0_20 = arith.constant 0 : index
    %25 = vector.load %arg11[%c0_19, %c0_20] : memref<128x256xbf16, #tpu.memory_space<vmem>>, vector<128x256xbf16>
    %cst_21 = arith.constant dense<0.000000e+00> : vector<32x256xf32>
    %26 = tpu.matmul %24, %25, %cst_21 {dimension_numbers = #tpu.dot_dimension_numbers<[1], [0], [0], [1], [0, 0, 1, 1], [], []>} : vector<32x128xbf16>, vector<128x256xbf16>, vector<32x256xf32> -> vector<32x256xf32>
    %c0_22 = arith.constant 0 : index
    %c0_23 = arith.constant 0 : index
    %27 = vector.load %arg12[%c0_22, %c0_23] : memref<1x256xf32, #tpu.memory_space<vmem>>, vector<1x256xf32>
    %28 = vector.broadcast %27 : vector<1x256xf32> to vector<32x256xf32>
    %29 = arith.addf %26, %28 : vector<32x256xf32>
    %30 = vector.extract_strided_slice %29 {offsets = [0, 0], sizes = [32, 16], strides = [1, 1]} : vector<32x256xf32> to vector<32x16xf32>
    %31 = vector.extract_strided_slice %29 {offsets = [0, 128], sizes = [32, 16], strides = [1, 1]} : vector<32x256xf32> to vector<32x16xf32>
    %c0_24 = arith.constant 0 : index
    %c0_25 = arith.constant 0 : index
    %32 = vector.load %arg3[%c0_24, %c0_25] : memref<16x16xf32, #tpu.memory_space<vmem>>, vector<16x16xf32>
    %c0_26 = arith.constant 0 : index
    %c0_27 = arith.constant 0 : index
    %33 = vector.load %arg4[%c0_26, %c0_27] : memref<16x16xf32, #tpu.memory_space<vmem>>, vector<16x16xf32>
    %34 = tpu.concatenate %32, %33 in 0 : vector<16x16xf32>, vector<16x16xf32> -> vector<32x16xf32>
    %cst_28 = arith.constant 5.000000e-01 : f32
    %35 = vector.broadcast %cst_28 : f32 to vector<32x16xf32>
    %36 = arith.mulf %31, %35 : vector<32x16xf32>
    %37 = math.exp %36 : vector<32x16xf32>
    %38 = arith.mulf %37, %34 : vector<32x16xf32>
    %39 = arith.addf %38, %30 : vector<32x16xf32>
    %40 = vector.extract_strided_slice %39 {offsets = [0, 0], sizes = [16, 16], strides = [1, 1]} : vector<32x16xf32> to vector<16x16xf32>
    %41 = vector.extract_strided_slice %39 {offsets = [16, 0], sizes = [16, 16], strides = [1, 1]} : vector<32x16xf32> to vector<16x16xf32>
    %42 = vector.extract_strided_slice %30 {offsets = [0, 0], sizes = [16, 16], strides = [1, 1]} : vector<32x16xf32> to vector<16x16xf32>
    %43 = vector.extract_strided_slice %30 {offsets = [16, 0], sizes = [16, 16], strides = [1, 1]} : vector<32x16xf32> to vector<16x16xf32>
    %44 = vector.extract_strided_slice %31 {offsets = [0, 0], sizes = [16, 16], strides = [1, 1]} : vector<32x16xf32> to vector<16x16xf32>
    %45 = vector.extract_strided_slice %31 {offsets = [16, 0], sizes = [16, 16], strides = [1, 1]} : vector<32x16xf32> to vector<16x16xf32>
    %46 = tpu.concatenate %40, %41 in 1 : vector<16x16xf32>, vector<16x16xf32> -> vector<16x32xf32>
    %47 = arith.truncf %46 : vector<16x32xf32> to vector<16x32xbf16>
    %c0_29 = arith.constant 0 : index
    %c0_30 = arith.constant 0 : index
    %48 = vector.load %arg13[%c0_29, %c0_30] : memref<32x128xbf16, #tpu.memory_space<vmem>>, vector<32x128xbf16>
    %cst_31 = arith.constant dense<0.000000e+00> : vector<16x128xf32>
    %49 = tpu.matmul %47, %48, %cst_31 {dimension_numbers = #tpu.dot_dimension_numbers<[1], [0], [0], [1], [0, 0, 1, 1], [], []>} : vector<16x32xbf16>, vector<32x128xbf16>, vector<16x128xf32> -> vector<16x128xf32>
    %c0_32 = arith.constant 0 : index
    %c0_33 = arith.constant 0 : index
    %50 = vector.load %arg14[%c0_32, %c0_33] : memref<1x128xf32, #tpu.memory_space<vmem>>, vector<1x128xf32>
    %51 = vector.broadcast %50 : vector<1x128xf32> to vector<16x128xf32>
    %52 = arith.addf %49, %51 : vector<16x128xf32>
    %cst_34 = arith.constant 0.000000e+00 : f32
    %53 = vector.broadcast %cst_34 : f32 to vector<16x128xf32>
    %54 = arith.maximumf %52, %53 : vector<16x128xf32>
    %55 = arith.truncf %54 : vector<16x128xf32> to vector<16x128xbf16>
    %c0_35 = arith.constant 0 : index
    %c0_36 = arith.constant 0 : index
    %56 = vector.load %arg15[%c0_35, %c0_36] : memref<128x128xbf16, #tpu.memory_space<vmem>>, vector<128x128xbf16>
    %cst_37 = arith.constant dense<0.000000e+00> : vector<16x128xf32>
    %57 = tpu.matmul %55, %56, %cst_37 {dimension_numbers = #tpu.dot_dimension_numbers<[1], [0], [0], [1], [0, 0, 1, 1], [], []>} : vector<16x128xbf16>, vector<128x128xbf16>, vector<16x128xf32> -> vector<16x128xf32>
    %c0_38 = arith.constant 0 : index
    %c0_39 = arith.constant 0 : index
    %58 = vector.load %arg16[%c0_38, %c0_39] : memref<1x128xf32, #tpu.memory_space<vmem>>, vector<1x128xf32>
    %59 = vector.broadcast %58 : vector<1x128xf32> to vector<16x128xf32>
    %60 = arith.addf %57, %59 : vector<16x128xf32>
    %61 = arith.truncf %60 : vector<16x128xf32> to vector<16x128xbf16>
    %c0_40 = arith.constant 0 : index
    %c0_41 = arith.constant 0 : index
    %62 = vector.load %arg17[%c0_40, %c0_41] : memref<128x128xbf16, #tpu.memory_space<vmem>>, vector<128x128xbf16>
    %cst_42 = arith.constant dense<0.000000e+00> : vector<16x128xf32>
    %63 = tpu.matmul %61, %62, %cst_42 {dimension_numbers = #tpu.dot_dimension_numbers<[1], [0], [0], [1], [0, 0, 1, 1], [], []>} : vector<16x128xbf16>, vector<128x128xbf16>, vector<16x128xf32> -> vector<16x128xf32>
    %c0_43 = arith.constant 0 : index
    %c0_44 = arith.constant 0 : index
    %64 = vector.load %arg18[%c0_43, %c0_44] : memref<1x128xf32, #tpu.memory_space<vmem>>, vector<1x128xf32>
    %65 = vector.broadcast %64 : vector<1x128xf32> to vector<16x128xf32>
    %66 = arith.addf %63, %65 : vector<16x128xf32>
    %67 = arith.truncf %66 : vector<16x128xf32> to vector<16x128xbf16>
    %c0_45 = arith.constant 0 : index
    %c0_46 = arith.constant 0 : index
    %68 = vector.load %arg19[%c0_45, %c0_46] : memref<128x128xbf16, #tpu.memory_space<vmem>>, vector<128x128xbf16>
    %cst_47 = arith.constant dense<0.000000e+00> : vector<16x128xf32>
    %69 = tpu.matmul %67, %68, %cst_47 {dimension_numbers = #tpu.dot_dimension_numbers<[1], [0], [0], [1], [0, 0, 1, 1], [], []>} : vector<16x128xbf16>, vector<128x128xbf16>, vector<16x128xf32> -> vector<16x128xf32>
    %c0_48 = arith.constant 0 : index
    %c0_49 = arith.constant 0 : index
    %70 = vector.load %arg20[%c0_48, %c0_49] : memref<1x128xf32, #tpu.memory_space<vmem>>, vector<1x128xf32>
    %71 = vector.broadcast %70 : vector<1x128xf32> to vector<16x128xf32>
    %72 = arith.addf %69, %71 : vector<16x128xf32>
    %cst_50 = arith.constant 0.000000e+00 : f32
    %73 = vector.broadcast %cst_50 : f32 to vector<16x128xf32>
    %74 = arith.maximumf %72, %73 : vector<16x128xf32>
    %75 = arith.truncf %74 : vector<16x128xf32> to vector<16x128xbf16>
    %c0_51 = arith.constant 0 : index
    %c0_52 = arith.constant 0 : index
    %76 = vector.load %arg21[%c0_51, %c0_52] : memref<128x128xbf16, #tpu.memory_space<vmem>>, vector<128x128xbf16>
    %cst_53 = arith.constant dense<0.000000e+00> : vector<16x128xf32>
    %77 = tpu.matmul %75, %76, %cst_53 {dimension_numbers = #tpu.dot_dimension_numbers<[1], [0], [0], [1], [0, 0, 1, 1], [], []>} : vector<16x128xbf16>, vector<128x128xbf16>, vector<16x128xf32> -> vector<16x128xf32>
    %c0_54 = arith.constant 0 : index
    %c0_55 = arith.constant 0 : index
    %78 = vector.load %arg22[%c0_54, %c0_55] : memref<1x128xf32, #tpu.memory_space<vmem>>, vector<1x128xf32>
    %79 = vector.broadcast %78 : vector<1x128xf32> to vector<16x128xf32>
    %80 = arith.addf %77, %79 : vector<16x128xf32>
    %cst_56 = arith.constant 0.000000e+00 : f32
    %81 = vector.broadcast %cst_56 : f32 to vector<16x128xf32>
    %82 = arith.maximumf %80, %81 : vector<16x128xf32>
    %83 = arith.truncf %82 : vector<16x128xf32> to vector<16x128xbf16>
    %c0_57 = arith.constant 0 : index
    %c0_58 = arith.constant 0 : index
    %84 = vector.load %arg23[%c0_57, %c0_58] : memref<128x128xbf16, #tpu.memory_space<vmem>>, vector<128x128xbf16>
    %cst_59 = arith.constant dense<0.000000e+00> : vector<16x128xf32>
    %85 = tpu.matmul %83, %84, %cst_59 {dimension_numbers = #tpu.dot_dimension_numbers<[1], [0], [0], [1], [0, 0, 1, 1], [], []>} : vector<16x128xbf16>, vector<128x128xbf16>, vector<16x128xf32> -> vector<16x128xf32>
    %c0_60 = arith.constant 0 : index
    %c0_61 = arith.constant 0 : index
    %86 = vector.load %arg24[%c0_60, %c0_61] : memref<1x128xf32, #tpu.memory_space<vmem>>, vector<1x128xf32>
    %87 = vector.broadcast %86 : vector<1x128xf32> to vector<16x128xf32>
    %88 = arith.addf %85, %87 : vector<16x128xf32>
    %cst_62 = arith.constant 0.000000e+00 : f32
    %89 = vector.broadcast %cst_62 : f32 to vector<16x128xf32>
    %90 = arith.maximumf %88, %89 : vector<16x128xf32>
    %91 = arith.truncf %90 : vector<16x128xf32> to vector<16x128xbf16>
    %c0_63 = arith.constant 0 : index
    %c0_64 = arith.constant 0 : index
    %92 = vector.load %arg25[%c0_63, %c0_64] : memref<128x128xbf16, #tpu.memory_space<vmem>>, vector<128x128xbf16>
    %cst_65 = arith.constant dense<0.000000e+00> : vector<16x128xf32>
    %93 = tpu.matmul %91, %92, %cst_65 {dimension_numbers = #tpu.dot_dimension_numbers<[1], [0], [0], [1], [0, 0, 1, 1], [], []>} : vector<16x128xbf16>, vector<128x128xbf16>, vector<16x128xf32> -> vector<16x128xf32>
    %c0_66 = arith.constant 0 : index
    %c0_67 = arith.constant 0 : index
    %94 = vector.load %arg26[%c0_66, %c0_67] : memref<1x128xf32, #tpu.memory_space<vmem>>, vector<1x128xf32>
    %95 = vector.broadcast %94 : vector<1x128xf32> to vector<16x128xf32>
    %96 = arith.addf %93, %95 : vector<16x128xf32>
    %97 = arith.negf %96 : vector<16x128xf32>
    %98 = math.exp %97 : vector<16x128xf32>
    %cst_68 = arith.constant 1.000000e+00 : f32
    %99 = vector.broadcast %cst_68 : f32 to vector<16x128xf32>
    %100 = arith.addf %99, %98 : vector<16x128xf32>
    %101 = arith.divf %99, %100 : vector<16x128xf32>
    %102 = vector.extract_strided_slice %66 {offsets = [0, 0], sizes = [16, 16], strides = [1, 1]} : vector<16x128xf32> to vector<16x16xf32>
    %103 = vector.extract_strided_slice %101 {offsets = [0, 0], sizes = [16, 48], strides = [1, 1]} : vector<16x128xf32> to vector<16x48xf32>
    %cst_69 = arith.constant 0.000000e+00 : f32
    %104 = vector.broadcast %cst_69 : f32 to vector<16x96xf32>
    %105 = tpu.concatenate %40, %41, %102, %103, %42, %44, %43, %45, %104 in 1 : vector<16x16xf32>, vector<16x16xf32>, vector<16x16xf32>, vector<16x48xf32>, vector<16x16xf32>, vector<16x16xf32>, vector<16x16xf32>, vector<16x16xf32>, vector<16x96xf32> -> vector<16x256xf32>
    %c0_70 = arith.constant 0 : index
    %c0_71 = arith.constant 0 : index
    %106 = vector.load %arg27[%c0_70, %c0_71] : memref<16x256xf32, #tpu.memory_space<vmem>>, vector<16x256xf32>
    tpu.vector_store %arg27[%c0_70, %c0_71], %105 {strides = array<i32>} : memref<16x256xf32, #tpu.memory_space<vmem>>, vector<16x256xf32>,
    return
  }
  func.func @transform_0(%arg0: i32) -> (i32, i32) {
    %c0_i32 = arith.constant 0 : i32
    %c0_i32_0 = arith.constant 0 : i32
    return %arg0, %c0_i32 : i32, i32
  }
  func.func @transform_1(%arg0: i32) -> (i32, i32) {
    %c0_i32 = arith.constant 0 : i32
    %c0_i32_0 = arith.constant 0 : i32
    return %arg0, %c0_i32 : i32, i32
  }
  func.func @transform_2(%arg0: i32) -> (i32, i32) {
    %c0_i32 = arith.constant 0 : i32
    %c0_i32_0 = arith.constant 0 : i32
    return %arg0, %c0_i32 : i32, i32
  }
  func.func @transform_3(%arg0: i32) -> (i32, i32) {
    %c0_i32 = arith.constant 0 : i32
    %c0_i32_0 = arith.constant 0 : i32
    return %arg0, %c0_i32 : i32, i32
  }
  func.func @transform_4(%arg0: i32) -> (i32, i32) {
    %c0_i32 = arith.constant 0 : i32
    %c0_i32_0 = arith.constant 0 : i32
    %c0_i32_1 = arith.constant 0 : i32
    return %c0_i32, %c0_i32_0 : i32, i32
  }
  func.func @transform_5(%arg0: i32) -> (i32, i32) {
    %c0_i32 = arith.constant 0 : i32
    %c0_i32_0 = arith.constant 0 : i32
    %c0_i32_1 = arith.constant 0 : i32
    return %c0_i32, %c0_i32_0 : i32, i32
  }
  func.func @transform_6(%arg0: i32) -> (i32, i32) {
    %c0_i32 = arith.constant 0 : i32
    %c0_i32_0 = arith.constant 0 : i32
    %c0_i32_1 = arith.constant 0 : i32
    return %c0_i32, %c0_i32_0 : i32, i32
  }
  func.func @transform_7(%arg0: i32) -> (i32, i32) {
    %c0_i32 = arith.constant 0 : i32
    %c0_i32_0 = arith.constant 0 : i32
    %c0_i32_1 = arith.constant 0 : i32
    return %c0_i32, %c0_i32_0 : i32, i32
  }
  func.func @transform_8(%arg0: i32) -> (i32, i32) {
    %c0_i32 = arith.constant 0 : i32
    %c0_i32_0 = arith.constant 0 : i32
    %c0_i32_1 = arith.constant 0 : i32
    return %c0_i32, %c0_i32_0 : i32, i32
  }
  func.func @transform_9(%arg0: i32) -> (i32, i32) {
    %c0_i32 = arith.constant 0 : i32
    %c0_i32_0 = arith.constant 0 : i32
    %c0_i32_1 = arith.constant 0 : i32
    return %c0_i32, %c0_i32_0 : i32, i32
  }
  func.func @transform_10(%arg0: i32) -> (i32, i32) {
    %c0_i32 = arith.constant 0 : i32
    %c0_i32_0 = arith.constant 0 : i32
    %c0_i32_1 = arith.constant 0 : i32
    return %c0_i32, %c0_i32_0 : i32, i32
  }
  func.func @transform_11(%arg0: i32) -> (i32, i32) {
    %c0_i32 = arith.constant 0 : i32
    %c0_i32_0 = arith.constant 0 : i32
    %c0_i32_1 = arith.constant 0 : i32
    return %c0_i32, %c0_i32_0 : i32, i32
  }
  func.func @transform_12(%arg0: i32) -> (i32, i32) {
    %c0_i32 = arith.constant 0 : i32
    %c0_i32_0 = arith.constant 0 : i32
    %c0_i32_1 = arith.constant 0 : i32
    return %c0_i32, %c0_i32_0 : i32, i32
  }
  func.func @transform_13(%arg0: i32) -> (i32, i32) {
    %c0_i32 = arith.constant 0 : i32
    %c0_i32_0 = arith.constant 0 : i32
    %c0_i32_1 = arith.constant 0 : i32
    return %c0_i32, %c0_i32_0 : i32, i32
  }
  func.func @transform_14(%arg0: i32) -> (i32, i32) {
    %c0_i32 = arith.constant 0 : i32
    %c0_i32_0 = arith.constant 0 : i32
    %c0_i32_1 = arith.constant 0 : i32
    return %c0_i32, %c0_i32_0 : i32, i32
  }
  func.func @transform_15(%arg0: i32) -> (i32, i32) {
    %c0_i32 = arith.constant 0 : i32
    %c0_i32_0 = arith.constant 0 : i32
    %c0_i32_1 = arith.constant 0 : i32
    return %c0_i32, %c0_i32_0 : i32, i32
  }
  func.func @transform_16(%arg0: i32) -> (i32, i32) {
    %c0_i32 = arith.constant 0 : i32
    %c0_i32_0 = arith.constant 0 : i32
    %c0_i32_1 = arith.constant 0 : i32
    return %c0_i32, %c0_i32_0 : i32, i32
  }
  func.func @transform_17(%arg0: i32) -> (i32, i32) {
    %c0_i32 = arith.constant 0 : i32
    %c0_i32_0 = arith.constant 0 : i32
    %c0_i32_1 = arith.constant 0 : i32
    return %c0_i32, %c0_i32_0 : i32, i32
  }
  func.func @transform_18(%arg0: i32) -> (i32, i32) {
    %c0_i32 = arith.constant 0 : i32
    %c0_i32_0 = arith.constant 0 : i32
    %c0_i32_1 = arith.constant 0 : i32
    return %c0_i32, %c0_i32_0 : i32, i32
  }
  func.func @transform_19(%arg0: i32) -> (i32, i32) {
    %c0_i32 = arith.constant 0 : i32
    %c0_i32_0 = arith.constant 0 : i32
    %c0_i32_1 = arith.constant 0 : i32
    return %c0_i32, %c0_i32_0 : i32, i32
  }
  func.func @transform_20(%arg0: i32) -> (i32, i32) {
    %c0_i32 = arith.constant 0 : i32
    %c0_i32_0 = arith.constant 0 : i32
    %c0_i32_1 = arith.constant 0 : i32
    return %c0_i32, %c0_i32_0 : i32, i32
  }
  func.func @transform_21(%arg0: i32) -> (i32, i32) {
    %c0_i32 = arith.constant 0 : i32
    %c0_i32_0 = arith.constant 0 : i32
    %c0_i32_1 = arith.constant 0 : i32
    return %c0_i32, %c0_i32_0 : i32, i32
  }
  func.func @transform_22(%arg0: i32) -> (i32, i32) {
    %c0_i32 = arith.constant 0 : i32
    %c0_i32_0 = arith.constant 0 : i32
    %c0_i32_1 = arith.constant 0 : i32
    return %c0_i32, %c0_i32_0 : i32, i32
  }
  func.func @transform_23(%arg0: i32) -> (i32, i32) {
    %c0_i32 = arith.constant 0 : i32
    %c0_i32_0 = arith.constant 0 : i32
    %c0_i32_1 = arith.constant 0 : i32
    return %c0_i32, %c0_i32_0 : i32, i32
  }
  func.func @transform_24(%arg0: i32) -> (i32, i32) {
    %c0_i32 = arith.constant 0 : i32
    %c0_i32_0 = arith.constant 0 : i32
    %c0_i32_1 = arith.constant 0 : i32
    return %c0_i32, %c0_i32_0 : i32, i32
  }
  func.func @transform_25(%arg0: i32) -> (i32, i32) {
    %c0_i32 = arith.constant 0 : i32
    %c0_i32_0 = arith.constant 0 : i32
    %c0_i32_1 = arith.constant 0 : i32
    return %c0_i32, %c0_i32_0 : i32, i32
  }
  func.func @transform_26(%arg0: i32) -> (i32, i32) {
    %c0_i32 = arith.constant 0 : i32
    %c0_i32_0 = arith.constant 0 : i32
    return %arg0, %c0_i32 : i32, i32
  }
}

</mosaic_0001>

<llo_original>
// kernel: tpu_custom_call.1
$region0: #{tpu_custom_call.1}
  #allocation0 [shape = 'u32[]', space=smem, size = 0x4, offset = 0x4, fixed_abs, tag = 'smem constant byte address 0x4 - core index']
  #allocation1 [shape = 'u32[144,128]{1,0:T(1,128)}', space=vmem, size = 0x12000, scoped, tag = 'internal scratch']
  %s0 = inlined_call_operand.hbm [shape: bf16[16,48], index: 0, kind: input, shape index: {}]
  %s1 = inlined_call_operand.hbm [shape: bf16[16,48], index: 1, kind: input, shape index: {}]
  %s2 = inlined_call_operand.hbm [shape: f32[16,16], index: 2, kind: input, shape index: {}]
  %s3 = inlined_call_operand.hbm [shape: f32[16,16], index: 3, kind: input, shape index: {}]
  %s4 = inlined_call_operand.hbm [shape: bf16[48,128], index: 4, kind: input, shape index: {}]
  %s5 = inlined_call_operand.vmem [shape: f32[1,128], index: 5, kind: input, shape index: {}]
  %s6 = inlined_call_operand.hbm [shape: bf16[128,128], index: 6, kind: input, shape index: {}]
  %s7 = inlined_call_operand.vmem [shape: f32[1,128], index: 7, kind: input, shape index: {}]
  %s8 = inlined_call_operand.hbm [shape: bf16[128,128], index: 8, kind: input, shape index: {}]
  %s9 = inlined_call_operand.vmem [shape: f32[1,128], index: 9, kind: input, shape index: {}]
  %s10 = inlined_call_operand.hbm [shape: bf16[128,256], index: 10, kind: input, shape index: {}]
  %s11 = inlined_call_operand.vmem [shape: f32[1,256], index: 11, kind: input, shape index: {}]
  %s12 = inlined_call_operand.vmem [shape: bf16[32,128], index: 12, kind: input, shape index: {}]
  %s13 = inlined_call_operand.vmem [shape: f32[1,128], index: 13, kind: input, shape index: {}]
  %s14 = inlined_call_operand.hbm [shape: bf16[128,128], index: 14, kind: input, shape index: {}]
  %s15 = inlined_call_operand.vmem [shape: f32[1,128], index: 15, kind: input, shape index: {}]
  %s16 = inlined_call_operand.hbm [shape: bf16[128,128], index: 16, kind: input, shape index: {}]
  %s17 = inlined_call_operand.vmem [shape: f32[1,128], index: 17, kind: input, shape index: {}]
  %s18 = inlined_call_operand.hbm [shape: bf16[128,128], index: 18, kind: input, shape index: {}]
  %s19 = inlined_call_operand.vmem [shape: f32[1,128], index: 19, kind: input, shape index: {}]
  %s20 = inlined_call_operand.hbm [shape: bf16[128,128], index: 20, kind: input, shape index: {}]
  %s21 = inlined_call_operand.vmem [shape: f32[1,128], index: 21, kind: input, shape index: {}]
  %s22 = inlined_call_operand.hbm [shape: bf16[128,128], index: 22, kind: input, shape index: {}]
  %s23 = inlined_call_operand.vmem [shape: f32[1,128], index: 23, kind: input, shape index: {}]
  %s24 = inlined_call_operand.hbm [shape: bf16[128,128], index: 24, kind: input, shape index: {}]
  %s25 = inlined_call_operand.vmem [shape: f32[1,128], index: 25, kind: input, shape index: {}]
  %s26 = inlined_call_operand.hbm [shape: f32[16,256], index: 26, kind: output, shape index: {}]
  %s27 = sld [smem:[#allocation0]]
  $region170: #{tpu_custom_call.1} parent=0
    _
  %s29 = ssub.s32 1, %s27
  %s30 = scalar_select 0, %s29, %s27
  $region1: #{tpu_custom_call.1} parent=0
    #allocation2 [shape = 'u8[4096]{0}', space=vmem, size = 0x1000, scoped, tag = 'input window, operand 0, single buffered']
    #allocation3 [shape = 's32[1]{0}', space=sflag, size = 0x4, scoped, tag = 'scoped memory for tpu_custom_call.1']
    #allocation4 [shape = 's32[1]{0}', space=sflag, size = 0x4, scoped, tag = 'scoped memory for tpu_custom_call.1']
    #allocation5 [shape = 'u8[4096]{0}', space=vmem, size = 0x1000, scoped, tag = 'input window, operand 1, single buffered']
    #allocation6 [shape = 's32[1]{0}', space=sflag, size = 0x4, scoped, tag = 'scoped memory for tpu_custom_call.1']
    #allocation7 [shape = 'u8[8192]{0}', space=vmem, size = 0x2000, scoped, tag = 'input window, operand 2, single buffered']
    #allocation8 [shape = 'u8[8192]{0}', space=vmem, size = 0x2000, scoped, tag = 'input window, operand 3, single buffered']
    #allocation9 [shape = 's32[1]{0}', space=sflag, size = 0x4, scoped, tag = 'scoped memory for tpu_custom_call.1']
    #allocation10 [shape = 'u8[12288]{0}', space=vmem, size = 0x3000, scoped, tag = 'input window, operand 4, single buffered']
    #allocation11 [shape = 'u8[32768]{0}', space=vmem, size = 0x8000, scoped, tag = 'input window, operand 6, single buffered']
    #allocation12 [shape = 's32[1]{0}', space=sflag, size = 0x4, scoped, tag = 'scoped memory for tpu_custom_call.1']
    #allocation13 [shape = 'u8[32768]{0}', space=vmem, size = 0x8000, scoped, tag = 'input window, operand 8, single buffered']
    #allocation14 [shape = 'u8[65536]{0}', space=vmem, size = 0x10000, scoped, tag = 'input window, operand 10, single buffered']
    #allocation15 [shape = 's32[1]{0}', space=sflag, size = 0x4, scoped, tag = 'scoped memory for tpu_custom_call.1']
    #allocation16 [shape = 'u8[32768]{0}', space=vmem, size = 0x8000, scoped, tag = 'input window, operand 14, single buffered']
    #allocation17 [shape = 'u8[32768]{0}', space=vmem, size = 0x8000, scoped, tag = 'input window, operand 16, single buffered']
    #allocation18 [shape = 's32[1]{0}', space=sflag, size = 0x4, scoped, tag = 'scoped memory for tpu_custom_call.1']
    #allocation19 [shape = 'u8[32768]{0}', space=vmem, size = 0x8000, scoped, tag = 'input window, operand 18, single buffered']
    #allocation20 [shape = 'u8[32768]{0}', space=vmem, size = 0x8000, scoped, tag = 'input window, operand 20, single buffered']
    #allocation21 [shape = 's32[1]{0}', space=sflag, size = 0x4, scoped, tag = 'scoped memory for tpu_custom_call.1']
    #allocation22 [shape = 'u8[32768]{0}', space=vmem, size = 0x8000, scoped, tag = 'input window, operand 22, single buffered']
    #allocation23 [shape = 'u8[32768]{0}', space=vmem, size = 0x8000, scoped, tag = 'input window, operand 24, single buffered']
    #allocation24 [shape = 's32[1]{0}', space=sflag, size = 0x4, scoped, tag = 'scoped memory for tpu_custom_call.1']
    #allocation25 [shape = 'u8[16384]{0}', space=vmem, size = 0x4000, scoped, tag = 'output window, operand 0, single buffered']
    %31 = vsyncpa [#allocation3], 0
    %32 = vsyncpa [#allocation6], 0
    %33 = vsyncpa [#allocation9], 0
    %34 = vsyncpa [#allocation12], 0
    %35 = vsyncpa [#allocation15], 0
    %36 = vsyncpa [#allocation18], 0
    %37 = vsyncpa [#allocation21], 0
    %38 = vsyncpa [#allocation24], 0
    %39 = vsyncpa [#allocation4], 0
    // Predicated region
    $region2: #{tpu_custom_call.1} parent=1 // pred_check
      _
    $region3: #{tpu_custom_call.1} parent=1 // pred_check_branch
      %41 = sbr.rel (0) target = $region5
    $region4: #{tpu_custom_call.1} parent=1 // pred_region
      %s43 = ssub.s32 128, 128
      %44 = vsyncadd [#allocation3], %s43
      %s45 = sshll.u32 [#allocation2], 4
      %s46 = int_to_ptr.vmem [resolvable:$true] %s45
      %51 = dma.hbm_to_vmem [thread:$0]  %s0, 128, %s46, [#allocation3], 64, 64, 4
    $region5: #{tpu_custom_call.1} parent=1 // pred_fallthru
      _
    // Predicated region
    $region6: #{tpu_custom_call.1} parent=1 // pred_check
      _
    $region7: #{tpu_custom_call.1} parent=1 // pred_check_branch
      %53 = sbr.rel (0) target = $region9
    $region8: #{tpu_custom_call.1} parent=1 // pred_region
      %s55 = ssub.s32 128, 128
      %56 = vsyncadd [#allocation6], %s55
      %s57 = sshll.u32 [#allocation5], 4
      %s58 = int_to_ptr.vmem [resolvable:$true] %s57
      %63 = dma.hbm_to_vmem [thread:$0]  %s1, 128, %s58, [#allocation6], 64, 64, 4
    $region9: #{tpu_custom_call.1} parent=1 // pred_fallthru
      _
    // Predicated region
    $region10: #{tpu_custom_call.1} parent=1 // pred_check
      _
    $region11: #{tpu_custom_call.1} parent=1 // pred_check_branch
      %65 = sbr.rel (0) target = $region13
    $region12: #{tpu_custom_call.1} parent=1 // pred_region
      %s67 = ssub.s32 256, 256
      %68 = vsyncadd [#allocation6], %s67
      %s69 = sshll.u32 [#allocation7], 4
      %s70 = int_to_ptr.vmem [resolvable:$true] %s69
      %75 = dma.hbm_to_vmem [thread:$0]  %s2, 256, %s70, [#allocation6], 128, 128, 8
    $region13: #{tpu_custom_call.1} parent=1 // pred_fallthru
      _
    // Predicated region
    $region14: #{tpu_custom_call.1} parent=1 // pred_check
      _
    $region15: #{tpu_custom_call.1} parent=1 // pred_check_branch
      %77 = sbr.rel (0) target = $region17
    $region16: #{tpu_custom_call.1} parent=1 // pred_region
      %s79 = ssub.s32 256, 256
      %80 = vsyncadd [#allocation9], %s79
      %s81 = sshll.u32 [#allocation8], 4
      %s82 = int_to_ptr.vmem [resolvable:$true] %s81
      %87 = dma.hbm_to_vmem [thread:$0]  %s3, 256, %s82, [#allocation9], 128, 128, 8
    $region17: #{tpu_custom_call.1} parent=1 // pred_fallthru
      _
    // Predicated region
    $region18: #{tpu_custom_call.1} parent=1 // pred_check
      _
    $region19: #{tpu_custom_call.1} parent=1 // pred_check_branch
      %89 = sbr.rel (0) target = $region21
    $region20: #{tpu_custom_call.1} parent=1 // pred_region
      %s91 = ssub.s32 384, 384
      %92 = vsyncadd [#allocation9], %s91
      %s93 = sshll.u32 [#allocation10], 4
      %s94 = int_to_ptr.vmem [resolvable:$true] %s93
      %99 = dma.hbm_to_vmem [thread:$0]  %s4, 384, %s94, [#allocation9], 64, 64, 4
    $region21: #{tpu_custom_call.1} parent=1 // pred_fallthru
      _
    // Predicated region
    $region22: #{tpu_custom_call.1} parent=1 // pred_check
      _
    $region23: #{tpu_custom_call.1} parent=1 // pred_check_branch
      %101 = sbr.rel (0) target = $region25
    $region24: #{tpu_custom_call.1} parent=1 // pred_region
      _
    $region25: #{tpu_custom_call.1} parent=1 // pred_fallthru
      _
    // Predicated region
    $region26: #{tpu_custom_call.1} parent=1 // pred_check
      _
    $region27: #{tpu_custom_call.1} parent=1 // pred_check_branch
      %103 = sbr.rel (0) target = $region29
    $region28: #{tpu_custom_call.1} parent=1 // pred_region
      %s105 = ssub.s32 1024, 1024
      %106 = vsyncadd [#allocation12], %s105
      %s107 = sshll.u32 [#allocation11], 4
      %s108 = int_to_ptr.vmem [resolvable:$true] %s107
      %113 = dma.hbm_to_vmem [thread:$0]  %s6, 1024, %s108, [#allocation12], 64, 64, 4
    $region29: #{tpu_custom_call.1} parent=1 // pred_fallthru
      _
    // Predicated region
    $region30: #{tpu_custom_call.1} parent=1 // pred_check
      _
    $region31: #{tpu_custom_call.1} parent=1 // pred_check_branch
      %115 = sbr.rel (0) target = $region33
    $region32: #{tpu_custom_call.1} parent=1 // pred_region
      _
    $region33: #{tpu_custom_call.1} parent=1 // pred_fallthru
      _
    // Predicated region
    $region34: #{tpu_custom_call.1} parent=1 // pred_check
      _
    $region35: #{tpu_custom_call.1} parent=1 // pred_check_branch
      %117 = sbr.rel (0) target = $region37
    $region36: #{tpu_custom_call.1} parent=1 // pred_region
      %s119 = ssub.s32 1024, 1024
      %120 = vsyncadd [#allocation12], %s119
      %s121 = sshll.u32 [#allocation13], 4
      %s122 = int_to_ptr.vmem [resolvable:$true] %s121
      %127 = dma.hbm_to_vmem [thread:$0]  %s8, 1024, %s122, [#allocation12], 64, 64, 4
    $region37: #{tpu_custom_call.1} parent=1 // pred_fallthru
      _
    // Predicated region
    $region38: #{tpu_custom_call.1} parent=1 // pred_check
      _
    $region39: #{tpu_custom_call.1} parent=1 // pred_check_branch
      %129 = sbr.rel (0) target = $region41
    $region40: #{tpu_custom_call.1} parent=1 // pred_region
      _
    $region41: #{tpu_custom_call.1} parent=1 // pred_fallthru
      _
    // Predicated region
    $region42: #{tpu_custom_call.1} parent=1 // pred_check
      _
    $region43: #{tpu_custom_call.1} parent=1 // pred_check_branch
      %131 = sbr.rel (0) target = $region45
    $region44: #{tpu_custom_call.1} parent=1 // pred_region
      %s133 = ssub.s32 2048, 2048
      %134 = vsyncadd [#allocation15], %s133
      %s135 = sshll.u32 [#allocation14], 4
      %s136 = int_to_ptr.vmem [resolvable:$true] %s135
      %141 = dma.hbm_to_vmem [thread:$0]  %s10, 2048, %s136, [#allocation15], 128, 128, 8
    $region45: #{tpu_custom_call.1} parent=1 // pred_fallthru
      _
    // Predicated region
    $region46: #{tpu_custom_call.1} parent=1 // pred_check
      _
    $region47: #{tpu_custom_call.1} parent=1 // pred_check_branch
      %143 = sbr.rel (0) target = $region49
    $region48: #{tpu_custom_call.1} parent=1 // pred_region
      _
    $region49: #{tpu_custom_call.1} parent=1 // pred_fallthru
      _
    // Predicated region
    $region50: #{tpu_custom_call.1} parent=1 // pred_check
      _
    $region51: #{tpu_custom_call.1} parent=1 // pred_check_branch
      %145 = sbr.rel (0) target = $region53
    $region52: #{tpu_custom_call.1} parent=1 // pred_region
      _
    $region53: #{tpu_custom_call.1} parent=1 // pred_fallthru
      _
    // Predicated region
    $region54: #{tpu_custom_call.1} parent=1 // pred_check
      _
    $region55: #{tpu_custom_call.1} parent=1 // pred_check_branch
      %147 = sbr.rel (0) target = $region57
    $region56: #{tpu_custom_call.1} parent=1 // pred_region
      _
    $region57: #{tpu_custom_call.1} parent=1 // pred_fallthru
      _
    // Predicated region
    $region58: #{tpu_custom_call.1} parent=1 // pred_check
      _
    $region59: #{tpu_custom_call.1} parent=1 // pred_check_branch
      %149 = sbr.rel (0) target = $region61
    $region60: #{tpu_custom_call.1} parent=1 // pred_region
      %s151 = ssub.s32 1024, 1024
      %152 = vsyncadd [#allocation15], %s151
      %s153 = sshll.u32 [#allocation16], 4
      %s154 = int_to_ptr.vmem [resolvable:$true] %s153
      %159 = dma.hbm_to_vmem [thread:$0]  %s14, 1024, %s154, [#allocation15], 64, 64, 4
    $region61: #{tpu_custom_call.1} parent=1 // pred_fallthru
      _
    // Predicated region
    $region62: #{tpu_custom_call.1} parent=1 // pred_check
      _
    $region63: #{tpu_custom_call.1} parent=1 // pred_check_branch
      %161 = sbr.rel (0) target = $region65
    $region64: #{tpu_custom_call.1} parent=1 // pred_region
      _
    $region65: #{tpu_custom_call.1} parent=1 // pred_fallthru
      _
    // Predicated region
    $region66: #{tpu_custom_call.1} parent=1 // pred_check
      _
    $region67: #{tpu_custom_call.1} parent=1 // pred_check_branch
      %163 = sbr.rel (0) target = $region69
    $region68: #{tpu_custom_call.1} parent=1 // pred_region
      %s165 = ssub.s32 1024, 1024
      %166 = vsyncadd [#allocation18], %s165
      %s167 = sshll.u32 [#allocation17], 4
      %s168 = int_to_ptr.vmem [resolvable:$true] %s167
      %173 = dma.hbm_to_vmem [thread:$0]  %s16, 1024, %s168, [#allocation18], 64, 64, 4
    $region69: #{tpu_custom_call.1} parent=1 // pred_fallthru
      _
    // Predicated region
    $region70: #{tpu_custom_call.1} parent=1 // pred_check
      _
    $region71: #{tpu_custom_call.1} parent=1 // pred_check_branch
      %175 = sbr.rel (0) target = $region73
    $region72: #{tpu_custom_call.1} parent=1 // pred_region
      _
    $region73: #{tpu_custom_call.1} parent=1 // pred_fallthru
      _
    // Predicated region
    $region74: #{tpu_custom_call.1} parent=1 // pred_check
      _
    $region75: #{tpu_custom_call.1} parent=1 // pred_check_branch
      %177 = sbr.rel (0) target = $region77
    $region76: #{tpu_custom_call.1} parent=1 // pred_region
      %s179 = ssub.s32 1024, 1024
      %180 = vsyncadd [#allocation18], %s179
      %s181 = sshll.u32 [#allocation19], 4
      %s182 = int_to_ptr.vmem [resolvable:$true] %s181
      %187 = dma.hbm_to_vmem [thread:$0]  %s18, 1024, %s182, [#allocation18], 64, 64, 4
    $region77: #{tpu_custom_call.1} parent=1 // pred_fallthru
      _
    // Predicated region
    $region78: #{tpu_custom_call.1} parent=1 // pred_check
      _
    $region79: #{tpu_custom_call.1} parent=1 // pred_check_branch
      %189 = sbr.rel (0) target = $region81
    $region80: #{tpu_custom_call.1} parent=1 // pred_region
      _
    $region81: #{tpu_custom_call.1} parent=1 // pred_fallthru
      _
    // Predicated region
    $region82: #{tpu_custom_call.1} parent=1 // pred_check
      _
    $region83: #{tpu_custom_call.1} parent=1 // pred_check_branch
      %191 = sbr.rel (0) target = $region85
    $region84: #{tpu_custom_call.1} parent=1 // pred_region
      %s193 = ssub.s32 1024, 1024
      %194 = vsyncadd [#allocation21], %s193
      %s195 = sshll.u32 [#allocation20], 4
      %s196 = int_to_ptr.vmem [resolvable:$true] %s195
      %201 = dma.hbm_to_vmem [thread:$0]  %s20, 1024, %s196, [#allocation21], 64, 64, 4
    $region85: #{tpu_custom_call.1} parent=1 // pred_fallthru
      _
    // Predicated region
    $region86: #{tpu_custom_call.1} parent=1 // pred_check
      _
    $region87: #{tpu_custom_call.1} parent=1 // pred_check_branch
      %203 = sbr.rel (0) target = $region89
    $region88: #{tpu_custom_call.1} parent=1 // pred_region
      _
    $region89: #{tpu_custom_call.1} parent=1 // pred_fallthru
      _
    // Predicated region
    $region90: #{tpu_custom_call.1} parent=1 // pred_check
      _
    $region91: #{tpu_custom_call.1} parent=1 // pred_check_branch
      %205 = sbr.rel (0) target = $region93
    $region92: #{tpu_custom_call.1} parent=1 // pred_region
      %s207 = ssub.s32 1024, 1024
      %208 = vsyncadd [#allocation21], %s207
      %s209 = sshll.u32 [#allocation22], 4
      %s210 = int_to_ptr.vmem [resolvable:$true] %s209
      %215 = dma.hbm_to_vmem [thread:$0]  %s22, 1024, %s210, [#allocation21], 64, 64, 4
    $region93: #{tpu_custom_call.1} parent=1 // pred_fallthru
      _
    // Predicated region
    $region94: #{tpu_custom_call.1} parent=1 // pred_check
      _
    $region95: #{tpu_custom_call.1} parent=1 // pred_check_branch
      %217 = sbr.rel (0) target = $region97
    $region96: #{tpu_custom_call.1} parent=1 // pred_region
      _
    $region97: #{tpu_custom_call.1} parent=1 // pred_fallthru
      _
    // Predicated region
    $region98: #{tpu_custom_call.1} parent=1 // pred_check
      _
    $region99: #{tpu_custom_call.1} parent=1 // pred_check_branch
      %219 = sbr.rel (0) target = $region101
    $region100: #{tpu_custom_call.1} parent=1 // pred_region
      %s221 = ssub.s32 1024, 1024
      %222 = vsyncadd [#allocation24], %s221
      %s223 = sshll.u32 [#allocation23], 4
      %s224 = int_to_ptr.vmem [resolvable:$true] %s223
      %229 = dma.hbm_to_vmem [thread:$0]  %s24, 1024, %s224, [#allocation24], 64, 64, 4
    $region101: #{tpu_custom_call.1} parent=1 // pred_fallthru
      _
    // Predicated region
    $region102: #{tpu_custom_call.1} parent=1 // pred_check
      _
    $region103: #{tpu_custom_call.1} parent=1 // pred_check_branch
      %231 = sbr.rel (0) target = $region105
    $region104: #{tpu_custom_call.1} parent=1 // pred_region
      _
    $region105: #{tpu_custom_call.1} parent=1 // pred_fallthru
      _
    // Predicated region
    $region106: #{tpu_custom_call.1} parent=1 // pred_check
      _
    $region107: #{tpu_custom_call.1} parent=1 // pred_check_branch
      %233 = sbr.rel (0) target = $region109
    $region108: #{tpu_custom_call.1} parent=1 // pred_region
      %234 = dma.done [#allocation3], 128
    $region109: #{tpu_custom_call.1} parent=1 // pred_fallthru
      _
    // Predicated region
    $region110: #{tpu_custom_call.1} parent=1 // pred_check
      _
    $region111: #{tpu_custom_call.1} parent=1 // pred_check_branch
      %236 = sbr.rel (0) target = $region113
    $region112: #{tpu_custom_call.1} parent=1 // pred_region
      %237 = dma.done [#allocation6], 128
    $region113: #{tpu_custom_call.1} parent=1 // pred_fallthru
      _
    // Predicated region
    $region114: #{tpu_custom_call.1} parent=1 // pred_check
      _
    $region115: #{tpu_custom_call.1} parent=1 // pred_check_branch
      %239 = sbr.rel (0) target = $region117
    $region116: #{tpu_custom_call.1} parent=1 // pred_region
      %240 = dma.done [#allocation6], 256
    $region117: #{tpu_custom_call.1} parent=1 // pred_fallthru
      _
    // Predicated region
    $region118: #{tpu_custom_call.1} parent=1 // pred_check
      _
    $region119: #{tpu_custom_call.1} parent=1 // pred_check_branch
      %242 = sbr.rel (0) target = $region121
    $region120: #{tpu_custom_call.1} parent=1 // pred_region
      %243 = dma.done [#allocation9], 256
    $region121: #{tpu_custom_call.1} parent=1 // pred_fallthru
      _
    // Predicated region
    $region122: #{tpu_custom_call.1} parent=1 // pred_check
      _
    $region123: #{tpu_custom_call.1} parent=1 // pred_check_branch
      %245 = sbr.rel (0) target = $region125
    $region124: #{tpu_custom_call.1} parent=1 // pred_region
      %246 = dma.done [#allocation9], 384
    $region125: #{tpu_custom_call.1} parent=1 // pred_fallthru
      _
    // Predicated region
    $region126: #{tpu_custom_call.1} parent=1 // pred_check
      _
    $region127: #{tpu_custom_call.1} parent=1 // pred_check_branch
      %248 = sbr.rel (0) target = $region129
    $region128: #{tpu_custom_call.1} parent=1 // pred_region
      %249 = dma.done [#allocation12], 1024
    $region129: #{tpu_custom_call.1} parent=1 // pred_fallthru
      _
    // Predicated region
    $region130: #{tpu_custom_call.1} parent=1 // pred_check
      _
    $region131: #{tpu_custom_call.1} parent=1 // pred_check_branch
      %251 = sbr.rel (0) target = $region133
    $region132: #{tpu_custom_call.1} parent=1 // pred_region
      %252 = dma.done [#allocation12], 1024
    $region133: #{tpu_custom_call.1} parent=1 // pred_fallthru
      _
    // Predicated region
    $region134: #{tpu_custom_call.1} parent=1 // pred_check
      _
    $region135: #{tpu_custom_call.1} parent=1 // pred_check_branch
      %254 = sbr.rel (0) target = $region137
    $region136: #{tpu_custom_call.1} parent=1 // pred_region
      %255 = dma.done [#allocation15], 2048
    $region137: #{tpu_custom_call.1} parent=1 // pred_fallthru
      _
    // Predicated region
    $region138: #{tpu_custom_call.1} parent=1 // pred_check
      _
    $region139: #{tpu_custom_call.1} parent=1 // pred_check_branch
      %257 = sbr.rel (0) target = $region141
    $region140: #{tpu_custom_call.1} parent=1 // pred_region
      %258 = dma.done [#allocation15], 1024
    $region141: #{tpu_custom_call.1} parent=1 // pred_fallthru
      _
    // Predicated region
    $region142: #{tpu_custom_call.1} parent=1 // pred_check
      _
    $region143: #{tpu_custom_call.1} parent=1 // pred_check_branch
      %260 = sbr.rel (0) target = $region145
    $region144: #{tpu_custom_call.1} parent=1 // pred_region
      %261 = dma.done [#allocation18], 1024
    $region145: #{tpu_custom_call.1} parent=1 // pred_fallthru
      _
    // Predicated region
    $region146: #{tpu_custom_call.1} parent=1 // pred_check
      _
    $region147: #{tpu_custom_call.1} parent=1 // pred_check_branch
      %263 = sbr.rel (0) target = $region149
    $region148: #{tpu_custom_call.1} parent=1 // pred_region
      %264 = dma.done [#allocation18], 1024
    $region149: #{tpu_custom_call.1} parent=1 // pred_fallthru
      _
    // Predicated region
    $region150: #{tpu_custom_call.1} parent=1 // pred_check
      _
    $region151: #{tpu_custom_call.1} parent=1 // pred_check_branch
      %266 = sbr.rel (0) target = $region153
    $region152: #{tpu_custom_call.1} parent=1 // pred_region
      %267 = dma.done [#allocation21], 1024
    $region153: #{tpu_custom_call.1} parent=1 // pred_fallthru
      _
    // Predicated region
    $region154: #{tpu_custom_call.1} parent=1 // pred_check
      _
    $region155: #{tpu_custom_call.1} parent=1 // pred_check_branch
      %269 = sbr.rel (0) target = $region157
    $region156: #{tpu_custom_call.1} parent=1 // pred_region
      %270 = dma.done [#allocation21], 1024
    $region157: #{tpu_custom_call.1} parent=1 // pred_fallthru
      _
    // Predicated region
    $region158: #{tpu_custom_call.1} parent=1 // pred_check
      _
    $region159: #{tpu_custom_call.1} parent=1 // pred_check_branch
      %272 = sbr.rel (0) target = $region161
    $region160: #{tpu_custom_call.1} parent=1 // pred_region
      %273 = dma.done [#allocation24], 1024
    $region161: #{tpu_custom_call.1} parent=1 // pred_fallthru
      _
    %v275 = vld [vmem:[#allocation2] sm:$0xf]
    %v276 = vld [vmem:[#allocation2 + $0x4] sm:$0xf]
    %v277 = vld [vmem:[#allocation5] sm:$0xf]
    %v278 = vld [vmem:[#allocation5 + $0x4] sm:$0xf]
    %v281 = vunpack.c.l.b16 %v275
    %v282 = vunpack.c.l.b16 %v276
    %v283 = vpack.c.b16 %v282, %v281
    %v286 = vunpack.c.l.b16 %v277
    %v287 = vunpack.c.l.b16 %v278
    %v288 = vpack.c.b16 %v287, %v286
    %v289 = vld [vmem:[#allocation10] sm:$0xf]
    %v290 = vld [vmem:[#allocation10 + $0x4] sm:$0xf]
    %v291 = vld [vmem:[#allocation10 + $0x8] sm:$0xf]
    %v292 = vld [vmem:[#allocation10 + $0xc] sm:$0xf]
    %v293 = vld [vmem:[#allocation10 + $0x10] sm:$0xf]
    %v294 = vld [vmem:[#allocation10 + $0x14] sm:$0xf]
    %v295 = vld [vmem:[%s5] sm:$0x1]
    %v297 = vlaneseq
    %v298 = vshrl.u32 %v297, 7
    %v299 = vsub.s32 0, %v298
    %v300 = vrot.slane %v295, %v299
    %v308 = vunpack.c.l.b16 %v289
    %v309 = vunpack.c.l.b16 %v290
    %v310 = vunpack.c.l.b16 %v291
    %v311 = vunpack.c.l.b16 %v292
    %v312 = vunpack.c.l.b16 %v293
    %v313 = vunpack.c.l.b16 %v294
    %v314 = vpack.c.b16 %v309, %v308
    %v315 = vpack.c.b16 %v311, %v310
    %v316 = vpack.c.b16 %v313, %v312
    %vm320 = vcmask 392192
    %v322 = vsel %vm320, %v283, 0
    %v325 = vsel %vm320, %v288, 0
    %327 = vmatprep.subr.bf16.mxu0 0
    %328 = vmatpush1.bf16.msra.mxu0 0
    %329 = vmatprep.subr.bf16.mxu0 0
    %330 = vmatpush1.bf16.msra.mxu0 0
    %331 = vmatprep.subr.bf16.mxu0 0
    %332 = vmatpush1.bf16.msra.mxu0 0
    %333 = vmatprep.subr.bf16.mxu0 0
    %334 = vmatpush1.bf16.msra.mxu0 0
    %335 = vmatprep.subr.bf16.mxu0 0
    %336 = vmatpush1.bf16.msra.mxu0 0
    %337 = vmatprep.subr.bf16.mxu0 0
    %338 = vmatpush1.bf16.msra.mxu0 %v316
    %339 = vmatprep.subr.bf16.mxu0 0
    %340 = vmatpush1.bf16.msra.mxu0 %v315
    %341 = vmatprep.subr.bf16.mxu0 0
    %342 = vmatpush1.bf16.msra.mxu0 %v314
    %343 = vmatprep.subr.bf16.mxu0 0
    %344 = vmatpush2.bf16.msra.mxu0 0
    %345 = vmatprep.subr.bf16.mxu0 0
    %346 = vmatpush2.bf16.msra.mxu0 0
    %347 = vmatprep.subr.bf16.mxu0 0
    %348 = vmatpush2.bf16.msra.mxu0 0
    %349 = vmatprep.subr.bf16.mxu0 0
    %350 = vmatpush2.bf16.msra.mxu0 0
    %351 = vmatprep.subr.bf16.mxu0 0
    %352 = vmatpush2.bf16.msra.mxu0 0
    %353 = vmatprep.subr.bf16.mxu0 0
    %354 = vmatpush2.bf16.msra.mxu0 0
    %355 = vmatprep.subr.bf16.mxu0 0
    %356 = vmatpush2.bf16.msra.mxu0 0
    %357 = vmatprep.subr.bf16.mxu0 0
    %358 = vmatpush2.bf16.msra.mxu0 0
    %359 = vmatprep.mubr.bf16.mxu0 0
    %360 = vmatmul.mubr.bf16.gmra.mxu0 %v322
    %v361 = vpop.f32.mrf.mxu0
    %v362 = vadd.f32 %v300, %v361
    %v363 = vpop.f32.mrf.mxu0
    %v364 = vpop.f32.mrf.mxu0
    %v365 = vadd.f32 %v300, %v364
    %v366 = vpop.f32.mrf.mxu0
    %367 = vmatprep.mubr.bf16.mxu0 0
    %368 = vmatmul.mubr.bf16.gmra.mxu0 %v325
    %v369 = vpop.f32.mrf.mxu0
    %v370 = vadd.f32 %v300, %v369
    %v371 = vpop.f32.mrf.mxu0
    %v372 = vpop.f32.mrf.mxu0
    %v373 = vadd.f32 %v300, %v372
    %v374 = vpop.f32.mrf.mxu0
    %375 = vdwg.mxu0
    %v376 = vmax.f32 %v362, 0.0
    %v377 = vmax.f32 %v365, 0.0
    %v378 = vmax.f32 %v370, 0.0
    %v379 = vmax.f32 %v373, 0.0
    %v380 = vpack.c.bf16 %v377, %v376
    %v381 = vpack.c.bf16 %v379, %v378
    %v382 = vld [vmem:[#allocation11] sm:$0xf]
    %v383 = vld [vmem:[#allocation11 + $0x4] sm:$0xf]
    %v384 = vld [vmem:[#allocation11 + $0x8] sm:$0xf]
    %v385 = vld [vmem:[#allocation11 + $0xc] sm:$0xf]
    %v386 = vld [vmem:[#allocation11 + $0x10] sm:$0xf]
    %v387 = vld [vmem:[#allocation11 + $0x14] sm:$0xf]
    %v388 = vld [vmem:[#allocation11 + $0x18] sm:$0xf]
    %v389 = vld [vmem:[#allocation11 + $0x1c] sm:$0xf]
    %v390 = vld [vmem:[#allocation11 + $0x20] sm:$0xf]
    %v391 = vld [vmem:[#allocation11 + $0x24] sm:$0xf]
    %v392 = vld [vmem:[#allocation11 + $0x28] sm:$0xf]
    %v393 = vld [vmem:[#allocation11 + $0x2c] sm:$0xf]
    %v394 = vld [vmem:[#allocation11 + $0x30] sm:$0xf]
    %v395 = vld [vmem:[#allocation11 + $0x34] sm:$0xf]
    %v396 = vld [vmem:[#allocation11 + $0x38] sm:$0xf]
    %v397 = vld [vmem:[#allocation11 + $0x3c] sm:$0xf]
    %v398 = vld [vmem:[%s7] sm:$0x1]
    %v400 = vlaneseq
    %v401 = vshrl.u32 %v400, 7
    %v402 = vsub.s32 0, %v401
    %v403 = vrot.slane %v398, %v402
    %v421 = vunpack.c.l.b16 %v382
    %v422 = vunpack.c.l.b16 %v383
    %v423 = vunpack.c.l.b16 %v384
    %v424 = vunpack.c.l.b16 %v385
    %v425 = vunpack.c.l.b16 %v386
    %v426 = vunpack.c.l.b16 %v387
    %v427 = vunpack.c.l.b16 %v388
    %v428 = vunpack.c.l.b16 %v389
    %v429 = vunpack.c.l.b16 %v390
    %v430 = vunpack.c.l.b16 %v391
    %v431 = vunpack.c.l.b16 %v392
    %v432 = vunpack.c.l.b16 %v393
    %v433 = vunpack.c.l.b16 %v394
    %v434 = vunpack.c.l.b16 %v395
    %v435 = vunpack.c.l.b16 %v396
    %v436 = vunpack.c.l.b16 %v397
    %v437 = vpack.c.b16 %v422, %v421
    %v438 = vpack.c.b16 %v424, %v423
    %v439 = vpack.c.b16 %v426, %v425
    %v440 = vpack.c.b16 %v428, %v427
    %v441 = vpack.c.b16 %v430, %v429
    %v442 = vpack.c.b16 %v432, %v431
    %v443 = vpack.c.b16 %v434, %v433
    %v444 = vpack.c.b16 %v436, %v435
    %453 = vmatprep.subr.bf16.mxu0 0
    %454 = vmatpush1.bf16.msra.mxu0 %v444
    %455 = vmatprep.subr.bf16.mxu0 0
    %456 = vmatpush1.bf16.msra.mxu0 %v443
    %457 = vmatprep.subr.bf16.mxu0 0
    %458 = vmatpush1.bf16.msra.mxu0 %v442
    %459 = vmatprep.subr.bf16.mxu0 0
    %460 = vmatpush1.bf16.msra.mxu0 %v441
    %461 = vmatprep.subr.bf16.mxu0 0
    %462 = vmatpush1.bf16.msra.mxu0 %v440
    %463 = vmatprep.subr.bf16.mxu0 0
    %464 = vmatpush1.bf16.msra.mxu0 %v439
    %465 = vmatprep.subr.bf16.mxu0 0
    %466 = vmatpush1.bf16.msra.mxu0 %v438
    %467 = vmatprep.subr.bf16.mxu0 0
    %468 = vmatpush1.bf16.msra.mxu0 %v437
    %469 = vmatprep.subr.bf16.mxu0 0
    %470 = vmatpush2.bf16.msra.mxu0 0
    %471 = vmatprep.subr.bf16.mxu0 0
    %472 = vmatpush2.bf16.msra.mxu0 0
    %473 = vmatprep.subr.bf16.mxu0 0
    %474 = vmatpush2.bf16.msra.mxu0 0
    %475 = vmatprep.subr.bf16.mxu0 0
    %476 = vmatpush2.bf16.msra.mxu0 0
    %477 = vmatprep.subr.bf16.mxu0 0
    %478 = vmatpush2.bf16.msra.mxu0 0
    %479 = vmatprep.subr.bf16.mxu0 0
    %480 = vmatpush2.bf16.msra.mxu0 0
    %481 = vmatprep.subr.bf16.mxu0 0
    %482 = vmatpush2.bf16.msra.mxu0 0
    %483 = vmatprep.subr.bf16.mxu0 0
    %484 = vmatpush2.bf16.msra.mxu0 0
    %485 = vmatprep.mubr.bf16.mxu0 0
    %486 = vmatmul.mubr.bf16.gmra.mxu0 %v380
    %v487 = vpop.f32.mrf.mxu0
    %v488 = vadd.f32 %v403, %v487
    %v489 = vpop.f32.mrf.mxu0
    %v490 = vpop.f32.mrf.mxu0
    %v491 = vadd.f32 %v403, %v490
    %v492 = vpop.f32.mrf.mxu0
    %493 = vmatprep.mubr.bf16.mxu0 0
    %494 = vmatmul.mubr.bf16.gmra.mxu0 %v381
    %v495 = vpop.f32.mrf.mxu0
    %v496 = vadd.f32 %v403, %v495
    %v497 = vpop.f32.mrf.mxu0
    %v498 = vpop.f32.mrf.mxu0
    %v499 = vadd.f32 %v403, %v498
    %v500 = vpop.f32.mrf.mxu0
    %501 = vdwg.mxu0
    %v502 = vmax.f32 %v488, 0.0
    %v503 = vmax.f32 %v491, 0.0
    %v504 = vmax.f32 %v496, 0.0
    %v505 = vmax.f32 %v499, 0.0
    %v506 = vpack.c.bf16 %v503, %v502
    %v507 = vpack.c.bf16 %v505, %v504
    %v508 = vld [vmem:[#allocation13] sm:$0xf]
    %v509 = vld [vmem:[#allocation13 + $0x4] sm:$0xf]
    %v510 = vld [vmem:[#allocation13 + $0x8] sm:$0xf]
    %v511 = vld [vmem:[#allocation13 + $0xc] sm:$0xf]
    %v512 = vld [vmem:[#allocation13 + $0x10] sm:$0xf]
    %v513 = vld [vmem:[#allocation13 + $0x14] sm:$0xf]
    %v514 = vld [vmem:[#allocation13 + $0x18] sm:$0xf]
    %v515 = vld [vmem:[#allocation13 + $0x1c] sm:$0xf]
    %v516 = vld [vmem:[#allocation13 + $0x20] sm:$0xf]
    %v517 = vld [vmem:[#allocation13 + $0x24] sm:$0xf]
    %v518 = vld [vmem:[#allocation13 + $0x28] sm:$0xf]
    %v519 = vld [vmem:[#allocation13 + $0x2c] sm:$0xf]
    %v520 = vld [vmem:[#allocation13 + $0x30] sm:$0xf]
    %v521 = vld [vmem:[#allocation13 + $0x34] sm:$0xf]
    %v522 = vld [vmem:[#allocation13 + $0x38] sm:$0xf]
    %v523 = vld [vmem:[#allocation13 + $0x3c] sm:$0xf]
    %v524 = vld [vmem:[%s9] sm:$0x1]
    %v526 = vlaneseq
    %v527 = vshrl.u32 %v526, 7
    %v528 = vsub.s32 0, %v527
    %v529 = vrot.slane %v524, %v528
    %v547 = vunpack.c.l.b16 %v508
    %v548 = vunpack.c.l.b16 %v509
    %v549 = vunpack.c.l.b16 %v510
    %v550 = vunpack.c.l.b16 %v511
    %v551 = vunpack.c.l.b16 %v512
    %v552 = vunpack.c.l.b16 %v513
    %v553 = vunpack.c.l.b16 %v514
    %v554 = vunpack.c.l.b16 %v515
    %v555 = vunpack.c.l.b16 %v516
    %v556 = vunpack.c.l.b16 %v517
    %v557 = vunpack.c.l.b16 %v518
    %v558 = vunpack.c.l.b16 %v519
    %v559 = vunpack.c.l.b16 %v520
    %v560 = vunpack.c.l.b16 %v521
    %v561 = vunpack.c.l.b16 %v522
    %v562 = vunpack.c.l.b16 %v523
    %v563 = vpack.c.b16 %v548, %v547
    %v564 = vpack.c.b16 %v550, %v549
    %v565 = vpack.c.b16 %v552, %v551
    %v566 = vpack.c.b16 %v554, %v553
    %v567 = vpack.c.b16 %v556, %v555
    %v568 = vpack.c.b16 %v558, %v557
    %v569 = vpack.c.b16 %v560, %v559
    %v570 = vpack.c.b16 %v562, %v561
    %579 = vmatprep.subr.bf16.mxu0 0
    %580 = vmatpush1.bf16.msra.mxu0 %v570
    %581 = vmatprep.subr.bf16.mxu0 0
    %582 = vmatpush1.bf16.msra.mxu0 %v569
    %583 = vmatprep.subr.bf16.mxu0 0
    %584 = vmatpush1.bf16.msra.mxu0 %v568
    %585 = vmatprep.subr.bf16.mxu0 0
    %586 = vmatpush1.bf16.msra.mxu0 %v567
    %587 = vmatprep.subr.bf16.mxu0 0
    %588 = vmatpush1.bf16.msra.mxu0 %v566
    %589 = vmatprep.subr.bf16.mxu0 0
    %590 = vmatpush1.bf16.msra.mxu0 %v565
    %591 = vmatprep.subr.bf16.mxu0 0
    %592 = vmatpush1.bf16.msra.mxu0 %v564
    %593 = vmatprep.subr.bf16.mxu0 0
    %594 = vmatpush1.bf16.msra.mxu0 %v563
    %595 = vmatprep.subr.bf16.mxu0 0
    %596 = vmatpush2.bf16.msra.mxu0 0
    %597 = vmatprep.subr.bf16.mxu0 0
    %598 = vmatpush2.bf16.msra.mxu0 0
    %599 = vmatprep.subr.bf16.mxu0 0
    %600 = vmatpush2.bf16.msra.mxu0 0
    %601 = vmatprep.subr.bf16.mxu0 0
    %602 = vmatpush2.bf16.msra.mxu0 0
    %603 = vmatprep.subr.bf16.mxu0 0
    %604 = vmatpush2.bf16.msra.mxu0 0
    %605 = vmatprep.subr.bf16.mxu0 0
    %606 = vmatpush2.bf16.msra.mxu0 0
    %607 = vmatprep.subr.bf16.mxu0 0
    %608 = vmatpush2.bf16.msra.mxu0 0
    %609 = vmatprep.subr.bf16.mxu0 0
    %610 = vmatpush2.bf16.msra.mxu0 0
    %611 = vmatprep.mubr.bf16.mxu0 0
    %612 = vmatmul.mubr.bf16.gmra.mxu0 %v506
    %v613 = vpop.f32.mrf.mxu0
    %v614 = vadd.f32 %v529, %v613
    %v615 = vpop.f32.mrf.mxu0
    %v616 = vpop.f32.mrf.mxu0
    %v617 = vadd.f32 %v529, %v616
    %v618 = vpop.f32.mrf.mxu0
    %619 = vmatprep.mubr.bf16.mxu0 0
    %620 = vmatmul.mubr.bf16.gmra.mxu0 %v507
    %v621 = vpop.f32.mrf.mxu0
    %v622 = vadd.f32 %v529, %v621
    %v623 = vpop.f32.mrf.mxu0
    %v624 = vpop.f32.mrf.mxu0
    %v625 = vadd.f32 %v529, %v624
    %v626 = vpop.f32.mrf.mxu0
    %627 = vdwg.mxu0
    %v628 = vpack.c.bf16 %v617, %v614
    %v629 = vpack.c.bf16 %v625, %v622
    %v630 = vld [vmem:[#allocation14] sm:$0xff]
    %v631 = vld [vmem:[#allocation14 + $0x8] sm:$0xff]
    %v632 = vld [vmem:[#allocation14 + $0x10] sm:$0xff]
    %v633 = vld [vmem:[#allocation14 + $0x18] sm:$0xff]
    %v634 = vld [vmem:[#allocation14 + $0x20] sm:$0xff]
    %v635 = vld [vmem:[#allocation14 + $0x28] sm:$0xff]
    %v636 = vld [vmem:[#allocation14 + $0x30] sm:$0xff]
    %v637 = vld [vmem:[#allocation14 + $0x38] sm:$0xff]
    %v638 = vld [vmem:[#allocation14 + $0x40] sm:$0xff]
    %v639 = vld [vmem:[#allocation14 + $0x48] sm:$0xff]
    %v640 = vld [vmem:[#allocation14 + $0x50] sm:$0xff]
    %v641 = vld [vmem:[#allocation14 + $0x58] sm:$0xff]
    %v642 = vld [vmem:[#allocation14 + $0x60] sm:$0xff]
    %v643 = vld [vmem:[#allocation14 + $0x68] sm:$0xff]
    %v644 = vld [vmem:[#allocation14 + $0x70] sm:$0xff]
    %v645 = vld [vmem:[#allocation14 + $0x78] sm:$0xff]
    %v646 = vld [vmem:[%s11] sm:$0x3]
    %v648 = vlaneseq
    %v649 = vshrl.u32 %v648, 7
    %v650 = vsub.s32 0, %v649
    %v651 = vrot.slane %v646, %v650
    %v652 = vlaneseq
    %v653 = vshrl.u32 %v652, 7
    %v654 = vsub.s32 1, %v653
    %v655 = vrot.slane %v646, %v654
    %v674 = vunpack.c.l.b16 %v630
    %v675 = vunpack.c.h.b16 %v630
    %v676 = vunpack.c.l.b16 %v631
    %v677 = vunpack.c.h.b16 %v631
    %v678 = vunpack.c.l.b16 %v632
    %v679 = vunpack.c.h.b16 %v632
    %v680 = vunpack.c.l.b16 %v633
    %v681 = vunpack.c.h.b16 %v633
    %v682 = vunpack.c.l.b16 %v634
    %v683 = vunpack.c.h.b16 %v634
    %v684 = vunpack.c.l.b16 %v635
    %v685 = vunpack.c.h.b16 %v635
    %v686 = vunpack.c.l.b16 %v636
    %v687 = vunpack.c.h.b16 %v636
    %v688 = vunpack.c.l.b16 %v637
    %v689 = vunpack.c.h.b16 %v637
    %v690 = vunpack.c.l.b16 %v638
    %v691 = vunpack.c.h.b16 %v638
    %v692 = vunpack.c.l.b16 %v639
    %v693 = vunpack.c.h.b16 %v639
    %v694 = vunpack.c.l.b16 %v640
    %v695 = vunpack.c.h.b16 %v640
    %v696 = vunpack.c.l.b16 %v641
    %v697 = vunpack.c.h.b16 %v641
    %v698 = vunpack.c.l.b16 %v642
    %v699 = vunpack.c.h.b16 %v642
    %v700 = vunpack.c.l.b16 %v643
    %v701 = vunpack.c.h.b16 %v643
    %v702 = vunpack.c.l.b16 %v644
    %v703 = vunpack.c.h.b16 %v644
    %v704 = vunpack.c.l.b16 %v645
    %v705 = vunpack.c.h.b16 %v645
    %v706 = vpack.c.b16 %v676, %v674
    %v707 = vpack.c.b16 %v677, %v675
    %v708 = vpack.c.b16 %v680, %v678
    %v709 = vpack.c.b16 %v681, %v679
    %v710 = vpack.c.b16 %v684, %v682
    %v711 = vpack.c.b16 %v685, %v683
    %v712 = vpack.c.b16 %v688, %v686
    %v713 = vpack.c.b16 %v689, %v687
    %v714 = vpack.c.b16 %v692, %v690
    %v715 = vpack.c.b16 %v693, %v691
    %v716 = vpack.c.b16 %v696, %v694
    %v717 = vpack.c.b16 %v697, %v695
    %v718 = vpack.c.b16 %v700, %v698
    %v719 = vpack.c.b16 %v701, %v699
    %v720 = vpack.c.b16 %v704, %v702
    %v721 = vpack.c.b16 %v705, %v703
    %738 = vmatprep.subr.bf16.mxu0 %v721
    %739 = vmatpush1.bf16.msra.mxu0 %v720
    %740 = vmatprep.subr.bf16.mxu0 %v719
    %741 = vmatpush1.bf16.msra.mxu0 %v718
    %742 = vmatprep.subr.bf16.mxu0 %v717
    %743 = vmatpush1.bf16.msra.mxu0 %v716
    %744 = vmatprep.subr.bf16.mxu0 %v715
    %745 = vmatpush1.bf16.msra.mxu0 %v714
    %746 = vmatprep.subr.bf16.mxu0 %v713
    %747 = vmatpush1.bf16.msra.mxu0 %v712
    %748 = vmatprep.subr.bf16.mxu0 %v711
    %749 = vmatpush1.bf16.msra.mxu0 %v710
    %750 = vmatprep.subr.bf16.mxu0 %v709
    %751 = vmatpush1.bf16.msra.mxu0 %v708
    %752 = vmatprep.subr.bf16.mxu0 %v707
    %753 = vmatpush1.bf16.msra.mxu0 %v706
    %754 = vmatprep.subr.bf16.mxu0 0
    %755 = vmatpush2.bf16.msra.mxu0 0
    %756 = vmatprep.subr.bf16.mxu0 0
    %757 = vmatpush2.bf16.msra.mxu0 0
    %758 = vmatprep.subr.bf16.mxu0 0
    %759 = vmatpush2.bf16.msra.mxu0 0
    %760 = vmatprep.subr.bf16.mxu0 0
    %761 = vmatpush2.bf16.msra.mxu0 0
    %762 = vmatprep.subr.bf16.mxu0 0
    %763 = vmatpush2.bf16.msra.mxu0 0
    %764 = vmatprep.subr.bf16.mxu0 0
    %765 = vmatpush2.bf16.msra.mxu0 0
    %766 = vmatprep.subr.bf16.mxu0 0
    %767 = vmatpush2.bf16.msra.mxu0 0
    %768 = vmatprep.subr.bf16.mxu0 0
    %769 = vmatpush2.bf16.msra.mxu0 0
    %770 = vmatprep.mubr.bf16.mxu0 0
    %771 = vmatmul.mubr.bf16.gmra.mxu0 %v628
    %v772 = vpop.f32.mrf.mxu0
    %v773 = vadd.f32 %v651, %v772
    %v774 = vpop.f32.mrf.mxu0
    %v775 = vadd.f32 %v655, %v774
    %v776 = vpop.f32.mrf.mxu0
    %v777 = vadd.f32 %v651, %v776
    %v778 = vpop.f32.mrf.mxu0
    %v779 = vadd.f32 %v655, %v778
    %780 = vmatprep.mubr.bf16.mxu0 0
    %781 = vmatmul.mubr.bf16.gmra.mxu0 %v629
    %v782 = vpop.f32.mrf.mxu0
    %v783 = vadd.f32 %v651, %v782
    %v784 = vpop.f32.mrf.mxu0
    %v785 = vadd.f32 %v655, %v784
    %v786 = vpop.f32.mrf.mxu0
    %v787 = vadd.f32 %v651, %v786
    %v788 = vpop.f32.mrf.mxu0
    %v789 = vadd.f32 %v655, %v788
    %790 = vdwg.mxu0
    %v791 = vld [vmem:[#allocation7] sm:$0xff]
    %v792 = vld [vmem:[#allocation7 + $0x8] sm:$0xff]
    %v793 = vld [vmem:[#allocation8] sm:$0xff]
    %v794 = vld [vmem:[#allocation8 + $0x8] sm:$0xff]
    %v795 = vmul.f32 %v775, 0.5
    %v796 = vmul.f32 %v779, 0.5
    %v797 = vmul.f32 %v785, 0.5
    %v798 = vmul.f32 %v789, 0.5
    %v799 = vmul.f32 %v795, 1.442695
    %v800 = vpow.pop %v799
    %v801 = vmul.f32 %v796, 1.442695
    %v802 = vpow.pop %v801
    %v803 = vmul.f32 %v797, 1.442695
    %v804 = vpow.pop %v803
    %v805 = vmul.f32 %v798, 1.442695
    %v806 = vpow.pop %v805
    %v807 = vmul.f32 %v800, %v791
    %v808 = vmul.f32 %v802, %v792
    %v809 = vmul.f32 %v804, %v793
    %v810 = vmul.f32 %v806, %v794
    %v811 = vadd.f32 %v807, %v773
    %v812 = vadd.f32 %v808, %v777
    %v813 = vadd.f32 %v809, %v783
    %v814 = vadd.f32 %v810, %v787
    %817 = vrot.lane.b32.xlu0 %v813, 16
    %v818 = vpop.permute.xlu0 %817
    %819 = vrot.lane.b32.xlu0 %v814, 16
    %v820 = vpop.permute.xlu0 %819
    %vm823 = vcmask 130048
    %v824 = vsel %vm823, %v811, %v818
    %v825 = vsel %vm823, %v812, %v820
    %v826 = vpack.c.bf16 %v825, %v824
    %v827 = vld [vmem:[%s12] sm:$0xf]
    %v828 = vld [vmem:[%s12 + $0x4] sm:$0xf]
    %v829 = vld [vmem:[%s12 + $0x8] sm:$0xf]
    %v830 = vld [vmem:[%s12 + $0xc] sm:$0xf]
    %v831 = vld [vmem:[%s13] sm:$0x1]
    %v833 = vlaneseq
    %v834 = vshrl.u32 %v833, 7
    %v835 = vsub.s32 0, %v834
    %v836 = vrot.slane %v831, %v835
    %v842 = vunpack.c.l.b16 %v827
    %v843 = vunpack.c.l.b16 %v828
    %v844 = vunpack.c.l.b16 %v829
    %v845 = vunpack.c.l.b16 %v830
    %v846 = vpack.c.b16 %v843, %v842
    %v847 = vpack.c.b16 %v845, %v844
    %vm850 = vcmask 261120
    %v852 = vsel %vm850, %v826, 0
    %854 = vmatprep.subr.bf16.mxu0 0
    %855 = vmatpush1.bf16.msra.mxu0 0
    %856 = vmatprep.subr.bf16.mxu0 0
    %857 = vmatpush1.bf16.msra.mxu0 0
    %858 = vmatprep.subr.bf16.mxu0 0
    %859 = vmatpush1.bf16.msra.mxu0 0
    %860 = vmatprep.subr.bf16.mxu0 0
    %861 = vmatpush1.bf16.msra.mxu0 0
    %862 = vmatprep.subr.bf16.mxu0 0
    %863 = vmatpush1.bf16.msra.mxu0 0
    %864 = vmatprep.subr.bf16.mxu0 0
    %865 = vmatpush1.bf16.msra.mxu0 0
    %866 = vmatprep.subr.bf16.mxu0 0
    %867 = vmatpush1.bf16.msra.mxu0 %v847
    %868 = vmatprep.subr.bf16.mxu0 0
    %869 = vmatpush1.bf16.msra.mxu0 %v846
    %870 = vmatprep.subr.bf16.mxu0 0
    %871 = vmatpush2.bf16.msra.mxu0 0
    %872 = vmatprep.subr.bf16.mxu0 0
    %873 = vmatpush2.bf16.msra.mxu0 0
    %874 = vmatprep.subr.bf16.mxu0 0
    %875 = vmatpush2.bf16.msra.mxu0 0
    %876 = vmatprep.subr.bf16.mxu0 0
    %877 = vmatpush2.bf16.msra.mxu0 0
    %878 = vmatprep.subr.bf16.mxu0 0
    %879 = vmatpush2.bf16.msra.mxu0 0
    %880 = vmatprep.subr.bf16.mxu0 0
    %881 = vmatpush2.bf16.msra.mxu0 0
    %882 = vmatprep.subr.bf16.mxu0 0
    %883 = vmatpush2.bf16.msra.mxu0 0
    %884 = vmatprep.subr.bf16.mxu0 0
    %885 = vmatpush2.bf16.msra.mxu0 0
    %886 = vmatprep.mubr.bf16.mxu0 0
    %887 = vmatmul.mubr.bf16.gmra.mxu0 %v852
    %v888 = vpop.f32.mrf.mxu0
    %v889 = vadd.f32 %v836, %v888
    %v890 = vpop.f32.mrf.mxu0
    %v891 = vpop.f32.mrf.mxu0
    %v892 = vadd.f32 %v836, %v891
    %v893 = vpop.f32.mrf.mxu0
    %894 = vdwg.mxu0
    %v895 = vmax.f32 %v889, 0.0
    %v896 = vmax.f32 %v892, 0.0
    %v897 = vpack.c.bf16 %v896, %v895
    %v898 = vld [vmem:[#allocation16] sm:$0xf]
    %v899 = vld [vmem:[#allocation16 + $0x4] sm:$0xf]
    %v900 = vld [vmem:[#allocation16 + $0x8] sm:$0xf]
    %v901 = vld [vmem:[#allocation16 + $0xc] sm:$0xf]
    %v902 = vld [vmem:[#allocation16 + $0x10] sm:$0xf]
    %v903 = vld [vmem:[#allocation16 + $0x14] sm:$0xf]
    %v904 = vld [vmem:[#allocation16 + $0x18] sm:$0xf]
    %v905 = vld [vmem:[#allocation16 + $0x1c] sm:$0xf]
    %v906 = vld [vmem:[#allocation16 + $0x20] sm:$0xf]
    %v907 = vld [vmem:[#allocation16 + $0x24] sm:$0xf]
    %v908 = vld [vmem:[#allocation16 + $0x28] sm:$0xf]
    %v909 = vld [vmem:[#allocation16 + $0x2c] sm:$0xf]
    %v910 = vld [vmem:[#allocation16 + $0x30] sm:$0xf]
    %v911 = vld [vmem:[#allocation16 + $0x34] sm:$0xf]
    %v912 = vld [vmem:[#allocation16 + $0x38] sm:$0xf]
    %v913 = vld [vmem:[#allocation16 + $0x3c] sm:$0xf]
    %v914 = vld [vmem:[%s15] sm:$0x1]
    %v916 = vlaneseq
    %v917 = vshrl.u32 %v916, 7
    %v918 = vsub.s32 0, %v917
    %v919 = vrot.slane %v914, %v918
    %v937 = vunpack.c.l.b16 %v898
    %v938 = vunpack.c.l.b16 %v899
    %v939 = vunpack.c.l.b16 %v900
    %v940 = vunpack.c.l.b16 %v901
    %v941 = vunpack.c.l.b16 %v902
    %v942 = vunpack.c.l.b16 %v903
    %v943 = vunpack.c.l.b16 %v904
    %v944 = vunpack.c.l.b16 %v905
    %v945 = vunpack.c.l.b16 %v906
    %v946 = vunpack.c.l.b16 %v907
    %v947 = vunpack.c.l.b16 %v908
    %v948 = vunpack.c.l.b16 %v909
    %v949 = vunpack.c.l.b16 %v910
    %v950 = vunpack.c.l.b16 %v911
    %v951 = vunpack.c.l.b16 %v912
    %v952 = vunpack.c.l.b16 %v913
    %v953 = vpack.c.b16 %v938, %v937
    %v954 = vpack.c.b16 %v940, %v939
    %v955 = vpack.c.b16 %v942, %v941
    %v956 = vpack.c.b16 %v944, %v943
    %v957 = vpack.c.b16 %v946, %v945
    %v958 = vpack.c.b16 %v948, %v947
    %v959 = vpack.c.b16 %v950, %v949
    %v960 = vpack.c.b16 %v952, %v951
    %969 = vmatprep.subr.bf16.mxu0 0
    %970 = vmatpush1.bf16.msra.mxu0 %v960
    %971 = vmatprep.subr.bf16.mxu0 0
    %972 = vmatpush1.bf16.msra.mxu0 %v959
    %973 = vmatprep.subr.bf16.mxu0 0
    %974 = vmatpush1.bf16.msra.mxu0 %v958
    %975 = vmatprep.subr.bf16.mxu0 0
    %976 = vmatpush1.bf16.msra.mxu0 %v957
    %977 = vmatprep.subr.bf16.mxu0 0
    %978 = vmatpush1.bf16.msra.mxu0 %v956
    %979 = vmatprep.subr.bf16.mxu0 0
    %980 = vmatpush1.bf16.msra.mxu0 %v955
    %981 = vmatprep.subr.bf16.mxu0 0
    %982 = vmatpush1.bf16.msra.mxu0 %v954
    %983 = vmatprep.subr.bf16.mxu0 0
    %984 = vmatpush1.bf16.msra.mxu0 %v953
    %985 = vmatprep.subr.bf16.mxu0 0
    %986 = vmatpush2.bf16.msra.mxu0 0
    %987 = vmatprep.subr.bf16.mxu0 0
    %988 = vmatpush2.bf16.msra.mxu0 0
    %989 = vmatprep.subr.bf16.mxu0 0
    %990 = vmatpush2.bf16.msra.mxu0 0
    %991 = vmatprep.subr.bf16.mxu0 0
    %992 = vmatpush2.bf16.msra.mxu0 0
    %993 = vmatprep.subr.bf16.mxu0 0
    %994 = vmatpush2.bf16.msra.mxu0 0
    %995 = vmatprep.subr.bf16.mxu0 0
    %996 = vmatpush2.bf16.msra.mxu0 0
    %997 = vmatprep.subr.bf16.mxu0 0
    %998 = vmatpush2.bf16.msra.mxu0 0
    %999 = vmatprep.subr.bf16.mxu0 0
    %1000 = vmatpush2.bf16.msra.mxu0 0
    %1001 = vmatprep.mubr.bf16.mxu0 0
    %1002 = vmatmul.mubr.bf16.gmra.mxu0 %v897
    %v1003 = vpop.f32.mrf.mxu0
    %v1004 = vadd.f32 %v919, %v1003
    %v1005 = vpop.f32.mrf.mxu0
    %v1006 = vpop.f32.mrf.mxu0
    %v1007 = vadd.f32 %v919, %v1006
    %v1008 = vpop.f32.mrf.mxu0
    %1009 = vdwg.mxu0
    %v1010 = vpack.c.bf16 %v1007, %v1004
    %v1011 = vld [vmem:[#allocation17] sm:$0xf]
    %v1012 = vld [vmem:[#allocation17 + $0x4] sm:$0xf]
    %v1013 = vld [vmem:[#allocation17 + $0x8] sm:$0xf]
    %v1014 = vld [vmem:[#allocation17 + $0xc] sm:$0xf]
    %v1015 = vld [vmem:[#allocation17 + $0x10] sm:$0xf]
    %v1016 = vld [vmem:[#allocation17 + $0x14] sm:$0xf]
    %v1017 = vld [vmem:[#allocation17 + $0x18] sm:$0xf]
    %v1018 = vld [vmem:[#allocation17 + $0x1c] sm:$0xf]
    %v1019 = vld [vmem:[#allocation17 + $0x20] sm:$0xf]
    %v1020 = vld [vmem:[#allocation17 + $0x24] sm:$0xf]
    %v1021 = vld [vmem:[#allocation17 + $0x28] sm:$0xf]
    %v1022 = vld [vmem:[#allocation17 + $0x2c] sm:$0xf]
    %v1023 = vld [vmem:[#allocation17 + $0x30] sm:$0xf]
    %v1024 = vld [vmem:[#allocation17 + $0x34] sm:$0xf]
    %v1025 = vld [vmem:[#allocation17 + $0x38] sm:$0xf]
    %v1026 = vld [vmem:[#allocation17 + $0x3c] sm:$0xf]
    %v1027 = vld [vmem:[%s17] sm:$0x1]
    %v1029 = vlaneseq
    %v1030 = vshrl.u32 %v1029, 7
    %v1031 = vsub.s32 0, %v1030
    %v1032 = vrot.slane %v1027, %v1031
    %v1050 = vunpack.c.l.b16 %v1011
    %v1051 = vunpack.c.l.b16 %v1012
    %v1052 = vunpack.c.l.b16 %v1013
    %v1053 = vunpack.c.l.b16 %v1014
    %v1054 = vunpack.c.l.b16 %v1015
    %v1055 = vunpack.c.l.b16 %v1016
    %v1056 = vunpack.c.l.b16 %v1017
    %v1057 = vunpack.c.l.b16 %v1018
    %v1058 = vunpack.c.l.b16 %v1019
    %v1059 = vunpack.c.l.b16 %v1020
    %v1060 = vunpack.c.l.b16 %v1021
    %v1061 = vunpack.c.l.b16 %v1022
    %v1062 = vunpack.c.l.b16 %v1023
    %v1063 = vunpack.c.l.b16 %v1024
    %v1064 = vunpack.c.l.b16 %v1025
    %v1065 = vunpack.c.l.b16 %v1026
    %v1066 = vpack.c.b16 %v1051, %v1050
    %v1067 = vpack.c.b16 %v1053, %v1052
    %v1068 = vpack.c.b16 %v1055, %v1054
    %v1069 = vpack.c.b16 %v1057, %v1056
    %v1070 = vpack.c.b16 %v1059, %v1058
    %v1071 = vpack.c.b16 %v1061, %v1060
    %v1072 = vpack.c.b16 %v1063, %v1062
    %v1073 = vpack.c.b16 %v1065, %v1064
    %1082 = vmatprep.subr.bf16.mxu0 0
    %1083 = vmatpush1.bf16.msra.mxu0 %v1073
    %1084 = vmatprep.subr.bf16.mxu0 0
    %1085 = vmatpush1.bf16.msra.mxu0 %v1072
    %1086 = vmatprep.subr.bf16.mxu0 0
    %1087 = vmatpush1.bf16.msra.mxu0 %v1071
    %1088 = vmatprep.subr.bf16.mxu0 0
    %1089 = vmatpush1.bf16.msra.mxu0 %v1070
    %1090 = vmatprep.subr.bf16.mxu0 0
    %1091 = vmatpush1.bf16.msra.mxu0 %v1069
    %1092 = vmatprep.subr.bf16.mxu0 0
    %1093 = vmatpush1.bf16.msra.mxu0 %v1068
    %1094 = vmatprep.subr.bf16.mxu0 0
    %1095 = vmatpush1.bf16.msra.mxu0 %v1067
    %1096 = vmatprep.subr.bf16.mxu0 0
    %1097 = vmatpush1.bf16.msra.mxu0 %v1066
    %1098 = vmatprep.subr.bf16.mxu0 0
    %1099 = vmatpush2.bf16.msra.mxu0 0
    %1100 = vmatprep.subr.bf16.mxu0 0
    %1101 = vmatpush2.bf16.msra.mxu0 0
    %1102 = vmatprep.subr.bf16.mxu0 0
    %1103 = vmatpush2.bf16.msra.mxu0 0
    %1104 = vmatprep.subr.bf16.mxu0 0
    %1105 = vmatpush2.bf16.msra.mxu0 0
    %1106 = vmatprep.subr.bf16.mxu0 0
    %1107 = vmatpush2.bf16.msra.mxu0 0
    %1108 = vmatprep.subr.bf16.mxu0 0
    %1109 = vmatpush2.bf16.msra.mxu0 0
    %1110 = vmatprep.subr.bf16.mxu0 0
    %1111 = vmatpush2.bf16.msra.mxu0 0
    %1112 = vmatprep.subr.bf16.mxu0 0
    %1113 = vmatpush2.bf16.msra.mxu0 0
    %1114 = vmatprep.mubr.bf16.mxu0 0
    %1115 = vmatmul.mubr.bf16.gmra.mxu0 %v1010
    %v1116 = vpop.f32.mrf.mxu0
    %v1117 = vadd.f32 %v1032, %v1116
    %v1118 = vpop.f32.mrf.mxu0
    %v1119 = vpop.f32.mrf.mxu0
    %v1120 = vadd.f32 %v1032, %v1119
    %v1121 = vpop.f32.mrf.mxu0
    %1122 = vdwg.mxu0
    %v1123 = vpack.c.bf16 %v1120, %v1117
    %v1124 = vld [vmem:[#allocation19] sm:$0xf]
    %v1125 = vld [vmem:[#allocation19 + $0x4] sm:$0xf]
    %v1126 = vld [vmem:[#allocation19 + $0x8] sm:$0xf]
    %v1127 = vld [vmem:[#allocation19 + $0xc] sm:$0xf]
    %v1128 = vld [vmem:[#allocation19 + $0x10] sm:$0xf]
    %v1129 = vld [vmem:[#allocation19 + $0x14] sm:$0xf]
    %v1130 = vld [vmem:[#allocation19 + $0x18] sm:$0xf]
    %v1131 = vld [vmem:[#allocation19 + $0x1c] sm:$0xf]
    %v1132 = vld [vmem:[#allocation19 + $0x20] sm:$0xf]
    %v1133 = vld [vmem:[#allocation19 + $0x24] sm:$0xf]
    %v1134 = vld [vmem:[#allocation19 + $0x28] sm:$0xf]
    %v1135 = vld [vmem:[#allocation19 + $0x2c] sm:$0xf]
    %v1136 = vld [vmem:[#allocation19 + $0x30] sm:$0xf]
    %v1137 = vld [vmem:[#allocation19 + $0x34] sm:$0xf]
    %v1138 = vld [vmem:[#allocation19 + $0x38] sm:$0xf]
    %v1139 = vld [vmem:[#allocation19 + $0x3c] sm:$0xf]
    %v1140 = vld [vmem:[%s19] sm:$0x1]
    %v1142 = vlaneseq
    %v1143 = vshrl.u32 %v1142, 7
    %v1144 = vsub.s32 0, %v1143
    %v1145 = vrot.slane %v1140, %v1144
    %v1163 = vunpack.c.l.b16 %v1124
    %v1164 = vunpack.c.l.b16 %v1125
    %v1165 = vunpack.c.l.b16 %v1126
    %v1166 = vunpack.c.l.b16 %v1127
    %v1167 = vunpack.c.l.b16 %v1128
    %v1168 = vunpack.c.l.b16 %v1129
    %v1169 = vunpack.c.l.b16 %v1130
    %v1170 = vunpack.c.l.b16 %v1131
    %v1171 = vunpack.c.l.b16 %v1132
    %v1172 = vunpack.c.l.b16 %v1133
    %v1173 = vunpack.c.l.b16 %v1134
    %v1174 = vunpack.c.l.b16 %v1135
    %v1175 = vunpack.c.l.b16 %v1136
    %v1176 = vunpack.c.l.b16 %v1137
    %v1177 = vunpack.c.l.b16 %v1138
    %v1178 = vunpack.c.l.b16 %v1139
    %v1179 = vpack.c.b16 %v1164, %v1163
    %v1180 = vpack.c.b16 %v1166, %v1165
    %v1181 = vpack.c.b16 %v1168, %v1167
    %v1182 = vpack.c.b16 %v1170, %v1169
    %v1183 = vpack.c.b16 %v1172, %v1171
    %v1184 = vpack.c.b16 %v1174, %v1173
    %v1185 = vpack.c.b16 %v1176, %v1175
    %v1186 = vpack.c.b16 %v1178, %v1177
    %1195 = vmatprep.subr.bf16.mxu0 0
    %1196 = vmatpush1.bf16.msra.mxu0 %v1186
    %1197 = vmatprep.subr.bf16.mxu0 0
    %1198 = vmatpush1.bf16.msra.mxu0 %v1185
    %1199 = vmatprep.subr.bf16.mxu0 0
    %1200 = vmatpush1.bf16.msra.mxu0 %v1184
    %1201 = vmatprep.subr.bf16.mxu0 0
    %1202 = vmatpush1.bf16.msra.mxu0 %v1183
    %1203 = vmatprep.subr.bf16.mxu0 0
    %1204 = vmatpush1.bf16.msra.mxu0 %v1182
    %1205 = vmatprep.subr.bf16.mxu0 0
    %1206 = vmatpush1.bf16.msra.mxu0 %v1181
    %1207 = vmatprep.subr.bf16.mxu0 0
    %1208 = vmatpush1.bf16.msra.mxu0 %v1180
    %1209 = vmatprep.subr.bf16.mxu0 0
    %1210 = vmatpush1.bf16.msra.mxu0 %v1179
    %1211 = vmatprep.subr.bf16.mxu0 0
    %1212 = vmatpush2.bf16.msra.mxu0 0
    %1213 = vmatprep.subr.bf16.mxu0 0
    %1214 = vmatpush2.bf16.msra.mxu0 0
    %1215 = vmatprep.subr.bf16.mxu0 0
    %1216 = vmatpush2.bf16.msra.mxu0 0
    %1217 = vmatprep.subr.bf16.mxu0 0
    %1218 = vmatpush2.bf16.msra.mxu0 0
    %1219 = vmatprep.subr.bf16.mxu0 0
    %1220 = vmatpush2.bf16.msra.mxu0 0
    %1221 = vmatprep.subr.bf16.mxu0 0
    %1222 = vmatpush2.bf16.msra.mxu0 0
    %1223 = vmatprep.subr.bf16.mxu0 0
    %1224 = vmatpush2.bf16.msra.mxu0 0
    %1225 = vmatprep.subr.bf16.mxu0 0
    %1226 = vmatpush2.bf16.msra.mxu0 0
    %1227 = vmatprep.mubr.bf16.mxu0 0
    %1228 = vmatmul.mubr.bf16.gmra.mxu0 %v1123
    %v1229 = vpop.f32.mrf.mxu0
    %v1230 = vadd.f32 %v1145, %v1229
    %v1231 = vpop.f32.mrf.mxu0
    %v1232 = vpop.f32.mrf.mxu0
    %v1233 = vadd.f32 %v1145, %v1232
    %v1234 = vpop.f32.mrf.mxu0
    %1235 = vdwg.mxu0
    %v1236 = vmax.f32 %v1230, 0.0
    %v1237 = vmax.f32 %v1233, 0.0
    %v1238 = vpack.c.bf16 %v1237, %v1236
    %v1239 = vld [vmem:[#allocation20] sm:$0xf]
    %v1240 = vld [vmem:[#allocation20 + $0x4] sm:$0xf]
    %v1241 = vld [vmem:[#allocation20 + $0x8] sm:$0xf]
    %v1242 = vld [vmem:[#allocation20 + $0xc] sm:$0xf]
    %v1243 = vld [vmem:[#allocation20 + $0x10] sm:$0xf]
    %v1244 = vld [vmem:[#allocation20 + $0x14] sm:$0xf]
    %v1245 = vld [vmem:[#allocation20 + $0x18] sm:$0xf]
    %v1246 = vld [vmem:[#allocation20 + $0x1c] sm:$0xf]
    %v1247 = vld [vmem:[#allocation20 + $0x20] sm:$0xf]
    %v1248 = vld [vmem:[#allocation20 + $0x24] sm:$0xf]
    %v1249 = vld [vmem:[#allocation20 + $0x28] sm:$0xf]
    %v1250 = vld [vmem:[#allocation20 + $0x2c] sm:$0xf]
    %v1251 = vld [vmem:[#allocation20 + $0x30] sm:$0xf]
    %v1252 = vld [vmem:[#allocation20 + $0x34] sm:$0xf]
    %v1253 = vld [vmem:[#allocation20 + $0x38] sm:$0xf]
    %v1254 = vld [vmem:[#allocation20 + $0x3c] sm:$0xf]
    %v1255 = vld [vmem:[%s21] sm:$0x1]
    %v1257 = vlaneseq
    %v1258 = vshrl.u32 %v1257, 7
    %v1259 = vsub.s32 0, %v1258
    %v1260 = vrot.slane %v1255, %v1259
    %v1278 = vunpack.c.l.b16 %v1239
    %v1279 = vunpack.c.l.b16 %v1240
    %v1280 = vunpack.c.l.b16 %v1241
    %v1281 = vunpack.c.l.b16 %v1242
    %v1282 = vunpack.c.l.b16 %v1243
    %v1283 = vunpack.c.l.b16 %v1244
    %v1284 = vunpack.c.l.b16 %v1245
    %v1285 = vunpack.c.l.b16 %v1246
    %v1286 = vunpack.c.l.b16 %v1247
    %v1287 = vunpack.c.l.b16 %v1248
    %v1288 = vunpack.c.l.b16 %v1249
    %v1289 = vunpack.c.l.b16 %v1250
    %v1290 = vunpack.c.l.b16 %v1251
    %v1291 = vunpack.c.l.b16 %v1252
    %v1292 = vunpack.c.l.b16 %v1253
    %v1293 = vunpack.c.l.b16 %v1254
    %v1294 = vpack.c.b16 %v1279, %v1278
    %v1295 = vpack.c.b16 %v1281, %v1280
    %v1296 = vpack.c.b16 %v1283, %v1282
    %v1297 = vpack.c.b16 %v1285, %v1284
    %v1298 = vpack.c.b16 %v1287, %v1286
    %v1299 = vpack.c.b16 %v1289, %v1288
    %v1300 = vpack.c.b16 %v1291, %v1290
    %v1301 = vpack.c.b16 %v1293, %v1292
    %1310 = vmatprep.subr.bf16.mxu0 0
    %1311 = vmatpush1.bf16.msra.mxu0 %v1301
    %1312 = vmatprep.subr.bf16.mxu0 0
    %1313 = vmatpush1.bf16.msra.mxu0 %v1300
    %1314 = vmatprep.subr.bf16.mxu0 0
    %1315 = vmatpush1.bf16.msra.mxu0 %v1299
    %1316 = vmatprep.subr.bf16.mxu0 0
    %1317 = vmatpush1.bf16.msra.mxu0 %v1298
    %1318 = vmatprep.subr.bf16.mxu0 0
    %1319 = vmatpush1.bf16.msra.mxu0 %v1297
    %1320 = vmatprep.subr.bf16.mxu0 0
    %1321 = vmatpush1.bf16.msra.mxu0 %v1296
    %1322 = vmatprep.subr.bf16.mxu0 0
    %1323 = vmatpush1.bf16.msra.mxu0 %v1295
    %1324 = vmatprep.subr.bf16.mxu0 0
    %1325 = vmatpush1.bf16.msra.mxu0 %v1294
    %1326 = vmatprep.subr.bf16.mxu0 0
    %1327 = vmatpush2.bf16.msra.mxu0 0
    %1328 = vmatprep.subr.bf16.mxu0 0
    %1329 = vmatpush2.bf16.msra.mxu0 0
    %1330 = vmatprep.subr.bf16.mxu0 0
    %1331 = vmatpush2.bf16.msra.mxu0 0
    %1332 = vmatprep.subr.bf16.mxu0 0
    %1333 = vmatpush2.bf16.msra.mxu0 0
    %1334 = vmatprep.subr.bf16.mxu0 0
    %1335 = vmatpush2.bf16.msra.mxu0 0
    %1336 = vmatprep.subr.bf16.mxu0 0
    %1337 = vmatpush2.bf16.msra.mxu0 0
    %1338 = vmatprep.subr.bf16.mxu0 0
    %1339 = vmatpush2.bf16.msra.mxu0 0
    %1340 = vmatprep.subr.bf16.mxu0 0
    %1341 = vmatpush2.bf16.msra.mxu0 0
    %1342 = vmatprep.mubr.bf16.mxu0 0
    %1343 = vmatmul.mubr.bf16.gmra.mxu0 %v1238
    %v1344 = vpop.f32.mrf.mxu0
    %v1345 = vadd.f32 %v1260, %v1344
    %v1346 = vpop.f32.mrf.mxu0
    %v1347 = vpop.f32.mrf.mxu0
    %v1348 = vadd.f32 %v1260, %v1347
    %v1349 = vpop.f32.mrf.mxu0
    %1350 = vdwg.mxu0
    %v1351 = vmax.f32 %v1345, 0.0
    %v1352 = vmax.f32 %v1348, 0.0
    %v1353 = vpack.c.bf16 %v1352, %v1351
    %v1354 = vld [vmem:[#allocation22] sm:$0xf]
    %v1355 = vld [vmem:[#allocation22 + $0x4] sm:$0xf]
    %v1356 = vld [vmem:[#allocation22 + $0x8] sm:$0xf]
    %v1357 = vld [vmem:[#allocation22 + $0xc] sm:$0xf]
    %v1358 = vld [vmem:[#allocation22 + $0x10] sm:$0xf]
    %v1359 = vld [vmem:[#allocation22 + $0x14] sm:$0xf]
    %v1360 = vld [vmem:[#allocation22 + $0x18] sm:$0xf]
    %v1361 = vld [vmem:[#allocation22 + $0x1c] sm:$0xf]
    %v1362 = vld [vmem:[#allocation22 + $0x20] sm:$0xf]
    %v1363 = vld [vmem:[#allocation22 + $0x24] sm:$0xf]
    %v1364 = vld [vmem:[#allocation22 + $0x28] sm:$0xf]
    %v1365 = vld [vmem:[#allocation22 + $0x2c] sm:$0xf]
    %v1366 = vld [vmem:[#allocation22 + $0x30] sm:$0xf]
    %v1367 = vld [vmem:[#allocation22 + $0x34] sm:$0xf]
    %v1368 = vld [vmem:[#allocation22 + $0x38] sm:$0xf]
    %v1369 = vld [vmem:[#allocation22 + $0x3c] sm:$0xf]
    %v1370 = vld [vmem:[%s23] sm:$0x1]
    %v1372 = vlaneseq
    %v1373 = vshrl.u32 %v1372, 7
    %v1374 = vsub.s32 0, %v1373
    %v1375 = vrot.slane %v1370, %v1374
    %v1393 = vunpack.c.l.b16 %v1354
    %v1394 = vunpack.c.l.b16 %v1355
    %v1395 = vunpack.c.l.b16 %v1356
    %v1396 = vunpack.c.l.b16 %v1357
    %v1397 = vunpack.c.l.b16 %v1358
    %v1398 = vunpack.c.l.b16 %v1359
    %v1399 = vunpack.c.l.b16 %v1360
    %v1400 = vunpack.c.l.b16 %v1361
    %v1401 = vunpack.c.l.b16 %v1362
    %v1402 = vunpack.c.l.b16 %v1363
    %v1403 = vunpack.c.l.b16 %v1364
    %v1404 = vunpack.c.l.b16 %v1365
    %v1405 = vunpack.c.l.b16 %v1366
    %v1406 = vunpack.c.l.b16 %v1367
    %v1407 = vunpack.c.l.b16 %v1368
    %v1408 = vunpack.c.l.b16 %v1369
    %v1409 = vpack.c.b16 %v1394, %v1393
    %v1410 = vpack.c.b16 %v1396, %v1395
    %v1411 = vpack.c.b16 %v1398, %v1397
    %v1412 = vpack.c.b16 %v1400, %v1399
    %v1413 = vpack.c.b16 %v1402, %v1401
    %v1414 = vpack.c.b16 %v1404, %v1403
    %v1415 = vpack.c.b16 %v1406, %v1405
    %v1416 = vpack.c.b16 %v1408, %v1407
    %1425 = vmatprep.subr.bf16.mxu0 0
    %1426 = vmatpush1.bf16.msra.mxu0 %v1416
    %1427 = vmatprep.subr.bf16.mxu0 0
    %1428 = vmatpush1.bf16.msra.mxu0 %v1415
    %1429 = vmatprep.subr.bf16.mxu0 0
    %1430 = vmatpush1.bf16.msra.mxu0 %v1414
    %1431 = vmatprep.subr.bf16.mxu0 0
    %1432 = vmatpush1.bf16.msra.mxu0 %v1413
    %1433 = vmatprep.subr.bf16.mxu0 0
    %1434 = vmatpush1.bf16.msra.mxu0 %v1412
    %1435 = vmatprep.subr.bf16.mxu0 0
    %1436 = vmatpush1.bf16.msra.mxu0 %v1411
    %1437 = vmatprep.subr.bf16.mxu0 0
    %1438 = vmatpush1.bf16.msra.mxu0 %v1410
    %1439 = vmatprep.subr.bf16.mxu0 0
    %1440 = vmatpush1.bf16.msra.mxu0 %v1409
    %1441 = vmatprep.subr.bf16.mxu0 0
    %1442 = vmatpush2.bf16.msra.mxu0 0
    %1443 = vmatprep.subr.bf16.mxu0 0
    %1444 = vmatpush2.bf16.msra.mxu0 0
    %1445 = vmatprep.subr.bf16.mxu0 0
    %1446 = vmatpush2.bf16.msra.mxu0 0
    %1447 = vmatprep.subr.bf16.mxu0 0
    %1448 = vmatpush2.bf16.msra.mxu0 0
    %1449 = vmatprep.subr.bf16.mxu0 0
    %1450 = vmatpush2.bf16.msra.mxu0 0
    %1451 = vmatprep.subr.bf16.mxu0 0
    %1452 = vmatpush2.bf16.msra.mxu0 0
    %1453 = vmatprep.subr.bf16.mxu0 0
    %1454 = vmatpush2.bf16.msra.mxu0 0
    %1455 = vmatprep.subr.bf16.mxu0 0
    %1456 = vmatpush2.bf16.msra.mxu0 0
    %1457 = vmatprep.mubr.bf16.mxu0 0
    %1458 = vmatmul.mubr.bf16.gmra.mxu0 %v1353
    %v1459 = vpop.f32.mrf.mxu0
    %v1460 = vadd.f32 %v1375, %v1459
    %v1461 = vpop.f32.mrf.mxu0
    %v1462 = vpop.f32.mrf.mxu0
    %v1463 = vadd.f32 %v1375, %v1462
    %v1464 = vpop.f32.mrf.mxu0
    %1465 = vdwg.mxu0
    %v1466 = vmax.f32 %v1460, 0.0
    %v1467 = vmax.f32 %v1463, 0.0
    %v1468 = vpack.c.bf16 %v1467, %v1466
    %v1469 = vld [vmem:[#allocation23] sm:$0xf]
    %v1470 = vld [vmem:[#allocation23 + $0x4] sm:$0xf]
    %v1471 = vld [vmem:[#allocation23 + $0x8] sm:$0xf]
    %v1472 = vld [vmem:[#allocation23 + $0xc] sm:$0xf]
    %v1473 = vld [vmem:[#allocation23 + $0x10] sm:$0xf]
    %v1474 = vld [vmem:[#allocation23 + $0x14] sm:$0xf]
    %v1475 = vld [vmem:[#allocation23 + $0x18] sm:$0xf]
    %v1476 = vld [vmem:[#allocation23 + $0x1c] sm:$0xf]
    %v1477 = vld [vmem:[#allocation23 + $0x20] sm:$0xf]
    %v1478 = vld [vmem:[#allocation23 + $0x24] sm:$0xf]
    %v1479 = vld [vmem:[#allocation23 + $0x28] sm:$0xf]
    %v1480 = vld [vmem:[#allocation23 + $0x2c] sm:$0xf]
    %v1481 = vld [vmem:[#allocation23 + $0x30] sm:$0xf]
    %v1482 = vld [vmem:[#allocation23 + $0x34] sm:$0xf]
    %v1483 = vld [vmem:[#allocation23 + $0x38] sm:$0xf]
    %v1484 = vld [vmem:[#allocation23 + $0x3c] sm:$0xf]
    %v1485 = vld [vmem:[%s25] sm:$0x1]
    %v1487 = vlaneseq
    %v1488 = vshrl.u32 %v1487, 7
    %v1489 = vsub.s32 0, %v1488
    %v1490 = vrot.slane %v1485, %v1489
    %v1508 = vunpack.c.l.b16 %v1469
    %v1509 = vunpack.c.l.b16 %v1470
    %v1510 = vunpack.c.l.b16 %v1471
    %v1511 = vunpack.c.l.b16 %v1472
    %v1512 = vunpack.c.l.b16 %v1473
    %v1513 = vunpack.c.l.b16 %v1474
    %v1514 = vunpack.c.l.b16 %v1475
    %v1515 = vunpack.c.l.b16 %v1476
    %v1516 = vunpack.c.l.b16 %v1477
    %v1517 = vunpack.c.l.b16 %v1478
    %v1518 = vunpack.c.l.b16 %v1479
    %v1519 = vunpack.c.l.b16 %v1480
    %v1520 = vunpack.c.l.b16 %v1481
    %v1521 = vunpack.c.l.b16 %v1482
    %v1522 = vunpack.c.l.b16 %v1483
    %v1523 = vunpack.c.l.b16 %v1484
    %v1524 = vpack.c.b16 %v1509, %v1508
    %v1525 = vpack.c.b16 %v1511, %v1510
    %v1526 = vpack.c.b16 %v1513, %v1512
    %v1527 = vpack.c.b16 %v1515, %v1514
    %v1528 = vpack.c.b16 %v1517, %v1516
    %v1529 = vpack.c.b16 %v1519, %v1518
    %v1530 = vpack.c.b16 %v1521, %v1520
    %v1531 = vpack.c.b16 %v1523, %v1522
    %1540 = vmatprep.subr.bf16.mxu0 0
    %1541 = vmatpush1.bf16.msra.mxu0 %v1531
    %1542 = vmatprep.subr.bf16.mxu0 0
    %1543 = vmatpush1.bf16.msra.mxu0 %v1530
    %1544 = vmatprep.subr.bf16.mxu0 0
    %1545 = vmatpush1.bf16.msra.mxu0 %v1529
    %1546 = vmatprep.subr.bf16.mxu0 0
    %1547 = vmatpush1.bf16.msra.mxu0 %v1528
    %1548 = vmatprep.subr.bf16.mxu0 0
    %1549 = vmatpush1.bf16.msra.mxu0 %v1527
    %1550 = vmatprep.subr.bf16.mxu0 0
    %1551 = vmatpush1.bf16.msra.mxu0 %v1526
    %1552 = vmatprep.subr.bf16.mxu0 0
    %1553 = vmatpush1.bf16.msra.mxu0 %v1525
    %1554 = vmatprep.subr.bf16.mxu0 0
    %1555 = vmatpush1.bf16.msra.mxu0 %v1524
    %1556 = vmatprep.subr.bf16.mxu0 0
    %1557 = vmatpush2.bf16.msra.mxu0 0
    %1558 = vmatprep.subr.bf16.mxu0 0
    %1559 = vmatpush2.bf16.msra.mxu0 0
    %1560 = vmatprep.subr.bf16.mxu0 0
    %1561 = vmatpush2.bf16.msra.mxu0 0
    %1562 = vmatprep.subr.bf16.mxu0 0
    %1563 = vmatpush2.bf16.msra.mxu0 0
    %1564 = vmatprep.subr.bf16.mxu0 0
    %1565 = vmatpush2.bf16.msra.mxu0 0
    %1566 = vmatprep.subr.bf16.mxu0 0
    %1567 = vmatpush2.bf16.msra.mxu0 0
    %1568 = vmatprep.subr.bf16.mxu0 0
    %1569 = vmatpush2.bf16.msra.mxu0 0
    %1570 = vmatprep.subr.bf16.mxu0 0
    %1571 = vmatpush2.bf16.msra.mxu0 0
    %1572 = vmatprep.mubr.bf16.mxu0 0
    %1573 = vmatmul.mubr.bf16.gmra.mxu0 %v1468
    %v1574 = vpop.f32.mrf.mxu0
    %v1575 = vadd.f32 %v1490, %v1574
    %v1576 = vpop.f32.mrf.mxu0
    %v1577 = vpop.f32.mrf.mxu0
    %v1578 = vadd.f32 %v1490, %v1577
    %v1579 = vpop.f32.mrf.mxu0
    %1580 = vdwg.mxu0
    %v1581 = vxor.u32 %v1575, 2147483648
    %v1582 = vxor.u32 %v1578, 2147483648
    %v1583 = vmul.f32 %v1581, 1.442695
    %v1584 = vpow.pop %v1583
    %v1585 = vmul.f32 %v1582, 1.442695
    %v1586 = vpow.pop %v1585
    %v1587 = vadd.f32 %v1584, 1.0
    %v1588 = vadd.f32 %v1586, 1.0
    %v1589 = vrcp.pop %v1587
    %v1590 = vmul.f32 1.0, %v1589
    %v1591 = vrcp.pop %v1588
    %v1592 = vmul.f32 1.0, %v1591
    %1595 = vrot.lane.b32.xlu0 %v1117, 32
    %v1596 = vpop.permute.xlu0 %1595
    %1597 = vrot.lane.b32.xlu0 %v1120, 32
    %v1598 = vpop.permute.xlu0 %1597
    %1603 = vrot.lane.b32.xlu0 %v1590, 48
    %v1604 = vpop.permute.xlu0 %1603
    %1605 = vrot.lane.b32.xlu0 %v1592, 48
    %v1606 = vpop.permute.xlu0 %1605
    %1611 = vrot.lane.b32.xlu0 %v773, 96
    %v1612 = vpop.permute.xlu0 %1611
    %1613 = vrot.lane.b32.xlu0 %v777, 96
    %v1614 = vpop.permute.xlu0 %1613
    %1619 = vrot.lane.b32.xlu0 %v775, 112
    %v1620 = vpop.permute.xlu0 %1619
    %1621 = vrot.lane.b32.xlu0 %v779, 112
    %v1622 = vpop.permute.xlu0 %1621
    %1627 = vrot.lane.b32.xlu0 %v785, 16
    %v1628 = vpop.permute.xlu0 %1627
    %1629 = vrot.lane.b32.xlu0 %v789, 16
    %v1630 = vpop.permute.xlu0 %1629
    %v1633 = vsel %vm850, %v824, %v1596
    %v1634 = vsel %vm850, %v825, %v1598
    %v1635 = vsel %vm320, %v1633, %v1604
    %v1636 = vsel %vm320, %v1634, %v1606
    %vm1637 = vcmask 785408
    %v1638 = vsel %vm1637, %v1635, %v1612
    %v1639 = vsel %vm1637, %v1636, %v1614
    %vm1640 = vcmask 916480
    %v1641 = vsel %vm1640, %v1638, %v1620
    %v1642 = vsel %vm1640, %v1639, %v1622
    %v1643 = vsel %vm823, %v783, %v1628
    %v1644 = vsel %vm823, %v787, %v1630
    %v1645 = vsel %vm850, %v1643, 0.0
    %v1646 = vsel %vm850, %v1644, 0.0
    %1647 = vst [vmem:[#allocation25] sm:$0xff] %v1641
    %1648 = vst [vmem:[#allocation25 + $0x8] sm:$0xff] %v1645
    %1649 = vst [vmem:[#allocation25 + $0x10] sm:$0xff] %v1642
    %1650 = vst [vmem:[#allocation25 + $0x18] sm:$0xff] %v1646
    // Predicated region
    $region162: #{tpu_custom_call.1} parent=1 // pred_check
      _
    $region163: #{tpu_custom_call.1} parent=1 // pred_check_branch
      %1652 = sbr.rel (0) target = $region165
    $region164: #{tpu_custom_call.1} parent=1 // pred_region
      %s1654 = ssub.s32 512, 512
      %1655 = vsyncadd [#allocation4], %s1654
      %s1656 = sshll.u32 [#allocation25], 4
      %s1657 = int_to_ptr.vmem [resolvable:$true] %s1656
      %1662 = dma.vmem_to_hbm [thread:$0]  %s1657, 512, %s26, [#allocation4], 256, 256, 16
    $region165: #{tpu_custom_call.1} parent=1 // pred_fallthru
      _
    // Predicated region
    $region166: #{tpu_custom_call.1} parent=1 // pred_check
      _
    $region167: #{tpu_custom_call.1} parent=1 // pred_check_branch
      %1664 = sbr.rel (0) target = $region169
    $region168: #{tpu_custom_call.1} parent=1 // pred_region
      %1665 = dma.done [#allocation4], 512
    $region169: #{tpu_custom_call.1} parent=1 // pred_fallthru
      _
    %1666 = vsyncpa [#allocation3], 1
    %1667 = vsyncpa [#allocation6], 1
    %1668 = vsyncpa [#allocation9], 1
    %1669 = vsyncpa [#allocation12], 1
    %1670 = vsyncpa [#allocation15], 1
    %1671 = vsyncpa [#allocation18], 1
    %1672 = vsyncpa [#allocation21], 1
    %1673 = vsyncpa [#allocation24], 1
    %1674 = vsyncpa [#allocation4], 1

</llo_original>
